<compile_context>
chip_gen: v6e
topology: v6e:2x2x1
jax: 0.10.0
libtpu: 0.0.40
codegen_flags: <defaults>
</compile_context>

<pallas_src>
import jax
import jax.numpy as jnp
from jax import lax
from jax.experimental import pallas as pl
from jax.experimental.pallas import tpu as pltpu

K = 7      # conv kernel size
PAD = 3    # conv padding


def _choose_tiling(N, C, HW, itemsize, budget, n_tile_cap=8):
    """Returns (n_tile, c_chunk, n_chunks)."""
    per_image = C * HW * itemsize
    if per_image <= budget or C < 8:
        # Whole C per block; batch as many images per grid step as the budget allows.
        max_tile = int(max(1, min(n_tile_cap, budget // max(per_image, 1))))
        if N >= 2:
            # Keep at least 2 parallel grid steps so a v7x megacore can split work.
            max_tile = min(max_tile, max(1, N // 2))
        n_tile = 1
        for t in range(1, int(min(max_tile, N)) + 1):
            if N % t == 0:
                n_tile = t
        return n_tile, C, 1
    # Chunk the channel axis (reduction); chunk must be a multiple of 8 (sublane rule).
    c_chunk = max(8, (int(budget // (HW * itemsize)) // 8) * 8)
    c_chunk = min(c_chunk, C)
    n_chunks = -(-C // c_chunk)
    return 1, c_chunk, n_chunks


def spatial_attention(x, weight, bias, *, in_block_budget_bytes=4 * 1024 * 1024):
    """x: (N, C, H, W); weight: (1, 2, 7, 7); bias: (1,) -> (N, 1, H, W)"""
    N, C, H, W = x.shape
    HW = H * W
    itemsize = jnp.dtype(x.dtype).itemsize
    n_tile, c_chunk, n_chunks = _choose_tiling(N, C, HW, itemsize, in_block_budget_bytes)
    inv_c = 1.0 / float(C)
    unroll = int(min(c_chunk, 8))
    has_tail = (C % c_chunk) != 0

    # Flat, lane-aligned zero padding for the conv: pooled maps live at lane
    # offset LPAD (a multiple of 128, >= 3*W+3) inside a (n_tile, Wpad) scratch.
    LPAD = ((PAD * (W + 1) + 127) // 128) * 128
    Wpad = 2 * LPAD + HW

    x_flat = x.reshape(N, C, HW)                       # free reshape, lane-dense
    w_flat = weight.reshape(-1).astype(jnp.float32)    # (2*K*K,) -> SMEM scalars
    b = bias.astype(jnp.float32)                       # (1,)

    # Per-dx column-validity masks for the flattened row-major conv:
    # output column x uses tap dx iff 0 <= x + dx - PAD < W (shared by all dy).
    cols = jnp.tile(jnp.arange(W, dtype=jnp.int32), H)                    # (HW,)
    dxs = jnp.arange(K, dtype=jnp.int32)[:, None]
    colmask = ((cols[None, :] + dxs - PAD >= 0)
               & (cols[None, :] + dxs - PAD < W)).astype(jnp.float32)     # (K, HW)

    def _conv_epilogue(w_ref, b_ref, mask_ref, o_ref, padm_ref, pada_ref,
                       max_map, sum_map):
        # Zero only the borders; the interior is fully overwritten below.
        zpad = jnp.zeros((n_tile, LPAD), dtype=jnp.float32)
        padm_ref[:, :LPAD] = zpad
        padm_ref[:, LPAD + HW:] = zpad
        pada_ref[:, :LPAD] = zpad
        pada_ref[:, LPAD + HW:] = zpad
        # Zero (not -inf) padding of the pooled max map matches conv zero padding.
        padm_ref[:, LPAD:LPAD + HW] = max_map
        pada_ref[:, LPAD:LPAD + HW] = sum_map * inv_c

        wv = [w_ref[i] for i in range(2 * K * K)]      # hoist SMEM scalar reads
        bv = b_ref[0]

        acc = jnp.zeros((n_tile, HW), dtype=jnp.float32)
        for dx in range(K):
            # Two independent per-dx accumulators (max / avg path) keep the FMA
            # chains short; every tap is read straight from VMEM scratch so only
            # a few (n_tile, HW) values stay live (no pre-materialized shifts).
            pm = jnp.zeros((n_tile, HW), dtype=jnp.float32)
            pa = jnp.zeros((n_tile, HW), dtype=jnp.float32)
            for dy in range(K):
                off = LPAD + (dy - PAD) * W + (dx - PAD)
                pm = pm + wv[dy * K + dx] * padm_ref[:, off:off + HW]
                pa = pa + wv[K * K + dy * K + dx] * pada_ref[:, off:off + HW]
            # Row OOB is already zero (padding); column OOB shares one mask per dx.
            acc = acc + (pm + pa) * mask_ref[dx:dx + 1, :]

        o_ref[:, 0, :] = jax.nn.sigmoid(acc + bv).astype(o_ref.dtype)

    def kernel(w_ref, b_ref, mask_ref, x_ref, o_ref,
               max_acc, sum_acc, padm_ref, pada_ref):
        m0 = jnp.full((n_tile, HW), -jnp.inf, dtype=jnp.float32)
        s0 = jnp.zeros((n_tile, HW), dtype=jnp.float32)

        def body(i, carry):
            m, s = carry
            xi = x_ref[:, i, :].astype(jnp.float32)        # (n_tile, HW), lane-dense
            return jnp.maximum(m, xi), s + xi

        if n_chunks == 1:
            # Whole C in one block: no accumulator carry, no init/finalize.
            m, s = lax.fori_loop(0, C, body, (m0, s0), unroll=unroll)
            _conv_epilogue(w_ref, b_ref, mask_ref, o_ref, padm_ref, pada_ref, m, s)
        else:
            c_idx = pl.program_id(1)

            @pl.when(c_idx == 0)
            def _init():
                max_acc[...] = m0
                sum_acc[...] = s0

            if not has_tail:
                m, s = lax.fori_loop(0, c_chunk, body,
                                     (max_acc[...], sum_acc[...]), unroll=unroll)
            else:
                base = c_idx * c_chunk

                def body_masked(i, carry):
                    m, s = carry
                    xi = x_ref[:, i, :].astype(jnp.float32)
                    valid = base + i < C
                    return (jnp.where(valid, jnp.maximum(m, xi), m),
                            jnp.where(valid, s + xi, s))

                m, s = lax.fori_loop(0, c_chunk, body_masked,
                                     (max_acc[...], sum_acc[...]), unroll=unroll)
            max_acc[...] = m
            sum_acc[...] = s

            @pl.when(c_idx == n_chunks - 1)
            def _finalize():
                _conv_epilogue(w_ref, b_ref, mask_ref, o_ref, padm_ref, pada_ref,
                               max_acc[...], sum_acc[...])

    cost = pl.CostEstimate(
        flops=int(N * HW * (2 * C + 4 * K * K + K)),
        transcendentals=int(N * HW),
        bytes_accessed=int(N * C * HW * itemsize + N * HW * itemsize
                           + K * HW * 4 + (2 * K * K + 1) * 4),
    )

    out = pl.pallas_call(
        kernel,
        out_shape=jax.ShapeDtypeStruct((N, 1, HW), x.dtype),
        grid=(N // n_tile, n_chunks),
        in_specs=[
            pl.BlockSpec(memory_space=pltpu.SMEM),                        # conv weights
            pl.BlockSpec(memory_space=pltpu.SMEM),                        # bias
            pl.BlockSpec((K, HW), lambda n, c: (0, 0)),                   # per-dx col masks
            pl.BlockSpec((n_tile, c_chunk, HW), lambda n, c: (n, c, 0)),  # x chunk
        ],
        out_specs=pl.BlockSpec((n_tile, 1, HW), lambda n, c: (n, 0, 0)),
        scratch_shapes=[
            pltpu.VMEM((n_tile, HW), jnp.float32),    # running channel max
            pltpu.VMEM((n_tile, HW), jnp.float32),    # running channel sum
            pltpu.VMEM((n_tile, Wpad), jnp.float32),  # flat zero-padded max map
            pltpu.VMEM((n_tile, Wpad), jnp.float32),  # flat zero-padded avg map
        ],
        compiler_params=pltpu.CompilerParams(
            dimension_semantics=("parallel", "arbitrary")),
        cost_estimate=cost,
    )(w_flat, b, colmask, x_flat)

    return out.reshape(N, 1, H, W)


def _reference(x, weight, bias):
    # Pure-JAX reference mirroring the PyTorch forward.
    max_out = jnp.max(x, axis=1, keepdims=True)
    avg_out = jnp.mean(x, axis=1, keepdims=True)
    cat = jnp.concatenate([max_out, avg_out], axis=1)        # (N, 2, H, W)
    out = jax.lax.conv_general_dilated(
        cat, weight, window_strides=(1, 1), padding=((PAD, PAD), (PAD, PAD)),
        dimension_numbers=("NCHW", "OIHW", "NCHW"))
    out = out + bias.reshape(1, 1, 1, 1)
    return jax.nn.sigmoid(out)


if __name__ == "__main__":
    key = jax.random.PRNGKey(0)
    kx, kw, kb = jax.random.split(key, 3)

    N, C, H, W = 2, 4, 16, 16
    x = jax.random.normal(kx, (N, C, H, W), dtype=jnp.float32)

    # Shapes from nn.Conv2d(2, 1, kernel_size=7, padding=3).
    weight = jax.random.normal(kw, (1, 2, K, K), dtype=jnp.float32) * 0.1
    bias = jax.random.normal(kb, (1,), dtype=jnp.float32) * 0.1

    # Single-block path (whole C per step).
    ref = _reference(x, weight, bias)
    out = jax.block_until_ready(spatial_attention(x, weight, bias))
    assert out.shape == (N, 1, H, W)
    assert jnp.allclose(out, ref, atol=1e-5, rtol=1e-5)

    # Batched n_tile > 1 path (two images per grid step).
    x4 = jax.random.normal(kb, (4, C, H, W), dtype=jnp.float32)
    ref4 = _reference(x4, weight, bias)
    out4 = jax.block_until_ready(spatial_attention(x4, weight, bias))
    assert jnp.allclose(out4, ref4, atol=1e-5, rtol=1e-5)

    # Chunked-C reduction path (forces c_chunk=8, n_chunks=2 with accumulators).
    x16 = jax.random.normal(kx, (2, 16, H, W), dtype=jnp.float32)
    ref16 = _reference(x16, weight, bias)
    out16 = jax.block_until_ready(
        spatial_attention(x16, weight, bias, in_block_budget_bytes=8 * H * W * 4))
    assert jnp.allclose(out16, ref16, atol=1e-5, rtol=1e-5)

    print("KERNEL_OK")
</pallas_src>

<mosaic_0001>
module attributes {stable_mosaic.version = 11 : i64} {
  func.func @kernel(%arg0: i32, %arg1: i32, %arg2: memref<98xf32, #tpu.memory_space<smem>>, %arg3: memref<1xf32, #tpu.memory_space<smem>>, %arg4: memref<7x256xf32, #tpu.memory_space<vmem>>, %arg5: memref<1x4x256xf32, #tpu.memory_space<vmem>>, %arg6: memref<1x1x256xf32, #tpu.memory_space<vmem>>, %arg7: memref<1x256xf32, #tpu.memory_space<vmem>>, %arg8: memref<1x256xf32, #tpu.memory_space<vmem>>, %arg9: memref<1x512xf32, #tpu.memory_space<vmem>>, %arg10: memref<1x512xf32, #tpu.memory_space<vmem>>) attributes {dimension_semantics = [#tpu.dimension_semantics<parallel>, #tpu.dimension_semantics<arbitrary>], iteration_bounds = array<i64: 2, 1>, scalar_prefetch = 0 : i64, scratch_operands = 4 : i64, tpu.core_type = #tpu.core_type<tc>, window_params = [{transform_indices = @transform_0, window_bounds = array<i64: 98>}, {transform_indices = @transform_1, window_bounds = array<i64: 1>}, {pipeline_mode = #tpu.pipeline_mode<synchronous>, transform_indices = @transform_2, window_bounds = array<i64: 7, 256>}, {transform_indices = @transform_3, window_bounds = array<i64: 1, 4, 256>}, {transform_indices = @transform_4, window_bounds = array<i64: 1, 1, 256>}]} {
    %cst = arith.constant 0xFF800000 : f32
    %0 = vector.broadcast %cst : f32 to vector<1x256xf32>
    %cst_0 = arith.constant 0.000000e+00 : f32
    %1 = vector.broadcast %cst_0 : f32 to vector<1x256xf32>
    %c0_i32 = arith.constant 0 : i32
    %c0 = arith.constant 0 : index
    %2 = arith.index_cast %c0_i32 : i32 to index
    %c0_1 = arith.constant 0 : index
    %3 = vector.load %arg5[%c0, %2, %c0_1] : memref<1x4x256xf32, #tpu.memory_space<vmem>>, vector<1x1x256xf32>
    %4 = vector.shape_cast %3 : vector<1x1x256xf32> to vector<1x256xf32>
    %5 = arith.maximumf %0, %4 : vector<1x256xf32>
    %6 = arith.addf %1, %4 : vector<1x256xf32>
    %c1_i32 = arith.constant 1 : i32
    %c0_2 = arith.constant 0 : index
    %7 = arith.index_cast %c1_i32 : i32 to index
    %c0_3 = arith.constant 0 : index
    %8 = vector.load %arg5[%c0_2, %7, %c0_3] : memref<1x4x256xf32, #tpu.memory_space<vmem>>, vector<1x1x256xf32>
    %9 = vector.shape_cast %8 : vector<1x1x256xf32> to vector<1x256xf32>
    %10 = arith.maximumf %5, %9 : vector<1x256xf32>
    %11 = arith.addf %6, %9 : vector<1x256xf32>
    %c2_i32 = arith.constant 2 : i32
    %c0_4 = arith.constant 0 : index
    %12 = arith.index_cast %c2_i32 : i32 to index
    %c0_5 = arith.constant 0 : index
    %13 = vector.load %arg5[%c0_4, %12, %c0_5] : memref<1x4x256xf32, #tpu.memory_space<vmem>>, vector<1x1x256xf32>
    %14 = vector.shape_cast %13 : vector<1x1x256xf32> to vector<1x256xf32>
    %15 = arith.maximumf %10, %14 : vector<1x256xf32>
    %16 = arith.addf %11, %14 : vector<1x256xf32>
    %c3_i32 = arith.constant 3 : i32
    %c0_6 = arith.constant 0 : index
    %17 = arith.index_cast %c3_i32 : i32 to index
    %c0_7 = arith.constant 0 : index
    %18 = vector.load %arg5[%c0_6, %17, %c0_7] : memref<1x4x256xf32, #tpu.memory_space<vmem>>, vector<1x1x256xf32>
    %19 = vector.shape_cast %18 : vector<1x1x256xf32> to vector<1x256xf32>
    %20 = arith.maximumf %15, %19 : vector<1x256xf32>
    %21 = arith.addf %16, %19 : vector<1x256xf32>
    %c4_i32 = arith.constant 4 : i32
    %cst_8 = arith.constant 0.000000e+00 : f32
    %22 = vector.broadcast %cst_8 : f32 to vector<1x128xf32>
    %c0_9 = arith.constant 0 : index
    %c0_10 = arith.constant 0 : index
    %23 = vector.load %arg9[%c0_9, %c0_10] : memref<1x512xf32, #tpu.memory_space<vmem>>, vector<1x128xf32>
    tpu.vector_store %arg9[%c0_9, %c0_10], %22 {strides = array<i32>} : memref<1x512xf32, #tpu.memory_space<vmem>>, vector<1x128xf32>,
    %c0_11 = arith.constant 0 : index
    %c384 = arith.constant 384 : index
    %24 = vector.load %arg9[%c0_11, %c384] : memref<1x512xf32, #tpu.memory_space<vmem>>, vector<1x128xf32>
    tpu.vector_store %arg9[%c0_11, %c384], %22 {strides = array<i32>} : memref<1x512xf32, #tpu.memory_space<vmem>>, vector<1x128xf32>,
    %c0_12 = arith.constant 0 : index
    %c0_13 = arith.constant 0 : index
    %25 = vector.load %arg10[%c0_12, %c0_13] : memref<1x512xf32, #tpu.memory_space<vmem>>, vector<1x128xf32>
    tpu.vector_store %arg10[%c0_12, %c0_13], %22 {strides = array<i32>} : memref<1x512xf32, #tpu.memory_space<vmem>>, vector<1x128xf32>,
    %c0_14 = arith.constant 0 : index
    %c384_15 = arith.constant 384 : index
    %26 = vector.load %arg10[%c0_14, %c384_15] : memref<1x512xf32, #tpu.memory_space<vmem>>, vector<1x128xf32>
    tpu.vector_store %arg10[%c0_14, %c384_15], %22 {strides = array<i32>} : memref<1x512xf32, #tpu.memory_space<vmem>>, vector<1x128xf32>,
    %c0_16 = arith.constant 0 : index
    %c128 = arith.constant 128 : index
    %27 = vector.load %arg9[%c0_16, %c128] : memref<1x512xf32, #tpu.memory_space<vmem>>, vector<1x256xf32>
    tpu.vector_store %arg9[%c0_16, %c128], %20 {strides = array<i32>} : memref<1x512xf32, #tpu.memory_space<vmem>>, vector<1x256xf32>,
    %cst_17 = arith.constant 2.500000e-01 : f32
    %28 = vector.broadcast %cst_17 : f32 to vector<1x256xf32>
    %29 = arith.mulf %21, %28 : vector<1x256xf32>
    %c0_18 = arith.constant 0 : index
    %c128_19 = arith.constant 128 : index
    %30 = vector.load %arg10[%c0_18, %c128_19] : memref<1x512xf32, #tpu.memory_space<vmem>>, vector<1x256xf32>
    tpu.vector_store %arg10[%c0_18, %c128_19], %29 {strides = array<i32>} : memref<1x512xf32, #tpu.memory_space<vmem>>, vector<1x256xf32>,
    %c0_20 = arith.constant 0 : index
    %31 = memref.load %arg2[%c0_20] : memref<98xf32, #tpu.memory_space<smem>>
    %c1 = arith.constant 1 : index
    %32 = memref.load %arg2[%c1] : memref<98xf32, #tpu.memory_space<smem>>
    %c2 = arith.constant 2 : index
    %33 = memref.load %arg2[%c2] : memref<98xf32, #tpu.memory_space<smem>>
    %c3 = arith.constant 3 : index
    %34 = memref.load %arg2[%c3] : memref<98xf32, #tpu.memory_space<smem>>
    %c4 = arith.constant 4 : index
    %35 = memref.load %arg2[%c4] : memref<98xf32, #tpu.memory_space<smem>>
    %c5 = arith.constant 5 : index
    %36 = memref.load %arg2[%c5] : memref<98xf32, #tpu.memory_space<smem>>
    %c6 = arith.constant 6 : index
    %37 = memref.load %arg2[%c6] : memref<98xf32, #tpu.memory_space<smem>>
    %c7 = arith.constant 7 : index
    %38 = memref.load %arg2[%c7] : memref<98xf32, #tpu.memory_space<smem>>
    %c8 = arith.constant 8 : index
    %39 = memref.load %arg2[%c8] : memref<98xf32, #tpu.memory_space<smem>>
    %c9 = arith.constant 9 : index
    %40 = memref.load %arg2[%c9] : memref<98xf32, #tpu.memory_space<smem>>
    %c10 = arith.constant 10 : index
    %41 = memref.load %arg2[%c10] : memref<98xf32, #tpu.memory_space<smem>>
    %c11 = arith.constant 11 : index
    %42 = memref.load %arg2[%c11] : memref<98xf32, #tpu.memory_space<smem>>
    %c12 = arith.constant 12 : index
    %43 = memref.load %arg2[%c12] : memref<98xf32, #tpu.memory_space<smem>>
    %c13 = arith.constant 13 : index
    %44 = memref.load %arg2[%c13] : memref<98xf32, #tpu.memory_space<smem>>
    %c14 = arith.constant 14 : index
    %45 = memref.load %arg2[%c14] : memref<98xf32, #tpu.memory_space<smem>>
    %c15 = arith.constant 15 : index
    %46 = memref.load %arg2[%c15] : memref<98xf32, #tpu.memory_space<smem>>
    %c16 = arith.constant 16 : index
    %47 = memref.load %arg2[%c16] : memref<98xf32, #tpu.memory_space<smem>>
    %c17 = arith.constant 17 : index
    %48 = memref.load %arg2[%c17] : memref<98xf32, #tpu.memory_space<smem>>
    %c18 = arith.constant 18 : index
    %49 = memref.load %arg2[%c18] : memref<98xf32, #tpu.memory_space<smem>>
    %c19 = arith.constant 19 : index
    %50 = memref.load %arg2[%c19] : memref<98xf32, #tpu.memory_space<smem>>
    %c20 = arith.constant 20 : index
    %51 = memref.load %arg2[%c20] : memref<98xf32, #tpu.memory_space<smem>>
    %c21 = arith.constant 21 : index
    %52 = memref.load %arg2[%c21] : memref<98xf32, #tpu.memory_space<smem>>
    %c22 = arith.constant 22 : index
    %53 = memref.load %arg2[%c22] : memref<98xf32, #tpu.memory_space<smem>>
    %c23 = arith.constant 23 : index
    %54 = memref.load %arg2[%c23] : memref<98xf32, #tpu.memory_space<smem>>
    %c24 = arith.constant 24 : index
    %55 = memref.load %arg2[%c24] : memref<98xf32, #tpu.memory_space<smem>>
    %c25 = arith.constant 25 : index
    %56 = memref.load %arg2[%c25] : memref<98xf32, #tpu.memory_space<smem>>
    %c26 = arith.constant 26 : index
    %57 = memref.load %arg2[%c26] : memref<98xf32, #tpu.memory_space<smem>>
    %c27 = arith.constant 27 : index
    %58 = memref.load %arg2[%c27] : memref<98xf32, #tpu.memory_space<smem>>
    %c28 = arith.constant 28 : index
    %59 = memref.load %arg2[%c28] : memref<98xf32, #tpu.memory_space<smem>>
    %c29 = arith.constant 29 : index
    %60 = memref.load %arg2[%c29] : memref<98xf32, #tpu.memory_space<smem>>
    %c30 = arith.constant 30 : index
    %61 = memref.load %arg2[%c30] : memref<98xf32, #tpu.memory_space<smem>>
    %c31 = arith.constant 31 : index
    %62 = memref.load %arg2[%c31] : memref<98xf32, #tpu.memory_space<smem>>
    %c32 = arith.constant 32 : index
    %63 = memref.load %arg2[%c32] : memref<98xf32, #tpu.memory_space<smem>>
    %c33 = arith.constant 33 : index
    %64 = memref.load %arg2[%c33] : memref<98xf32, #tpu.memory_space<smem>>
    %c34 = arith.constant 34 : index
    %65 = memref.load %arg2[%c34] : memref<98xf32, #tpu.memory_space<smem>>
    %c35 = arith.constant 35 : index
    %66 = memref.load %arg2[%c35] : memref<98xf32, #tpu.memory_space<smem>>
    %c36 = arith.constant 36 : index
    %67 = memref.load %arg2[%c36] : memref<98xf32, #tpu.memory_space<smem>>
    %c37 = arith.constant 37 : index
    %68 = memref.load %arg2[%c37] : memref<98xf32, #tpu.memory_space<smem>>
    %c38 = arith.constant 38 : index
    %69 = memref.load %arg2[%c38] : memref<98xf32, #tpu.memory_space<smem>>
    %c39 = arith.constant 39 : index
    %70 = memref.load %arg2[%c39] : memref<98xf32, #tpu.memory_space<smem>>
    %c40 = arith.constant 40 : index
    %71 = memref.load %arg2[%c40] : memref<98xf32, #tpu.memory_space<smem>>
    %c41 = arith.constant 41 : index
    %72 = memref.load %arg2[%c41] : memref<98xf32, #tpu.memory_space<smem>>
    %c42 = arith.constant 42 : index
    %73 = memref.load %arg2[%c42] : memref<98xf32, #tpu.memory_space<smem>>
    %c43 = arith.constant 43 : index
    %74 = memref.load %arg2[%c43] : memref<98xf32, #tpu.memory_space<smem>>
    %c44 = arith.constant 44 : index
    %75 = memref.load %arg2[%c44] : memref<98xf32, #tpu.memory_space<smem>>
    %c45 = arith.constant 45 : index
    %76 = memref.load %arg2[%c45] : memref<98xf32, #tpu.memory_space<smem>>
    %c46 = arith.constant 46 : index
    %77 = memref.load %arg2[%c46] : memref<98xf32, #tpu.memory_space<smem>>
    %c47 = arith.constant 47 : index
    %78 = memref.load %arg2[%c47] : memref<98xf32, #tpu.memory_space<smem>>
    %c48 = arith.constant 48 : index
    %79 = memref.load %arg2[%c48] : memref<98xf32, #tpu.memory_space<smem>>
    %c49 = arith.constant 49 : index
    %80 = memref.load %arg2[%c49] : memref<98xf32, #tpu.memory_space<smem>>
    %c50 = arith.constant 50 : index
    %81 = memref.load %arg2[%c50] : memref<98xf32, #tpu.memory_space<smem>>
    %c51 = arith.constant 51 : index
    %82 = memref.load %arg2[%c51] : memref<98xf32, #tpu.memory_space<smem>>
    %c52 = arith.constant 52 : index
    %83 = memref.load %arg2[%c52] : memref<98xf32, #tpu.memory_space<smem>>
    %c53 = arith.constant 53 : index
    %84 = memref.load %arg2[%c53] : memref<98xf32, #tpu.memory_space<smem>>
    %c54 = arith.constant 54 : index
    %85 = memref.load %arg2[%c54] : memref<98xf32, #tpu.memory_space<smem>>
    %c55 = arith.constant 55 : index
    %86 = memref.load %arg2[%c55] : memref<98xf32, #tpu.memory_space<smem>>
    %c56 = arith.constant 56 : index
    %87 = memref.load %arg2[%c56] : memref<98xf32, #tpu.memory_space<smem>>
    %c57 = arith.constant 57 : index
    %88 = memref.load %arg2[%c57] : memref<98xf32, #tpu.memory_space<smem>>
    %c58 = arith.constant 58 : index
    %89 = memref.load %arg2[%c58] : memref<98xf32, #tpu.memory_space<smem>>
    %c59 = arith.constant 59 : index
    %90 = memref.load %arg2[%c59] : memref<98xf32, #tpu.memory_space<smem>>
    %c60 = arith.constant 60 : index
    %91 = memref.load %arg2[%c60] : memref<98xf32, #tpu.memory_space<smem>>
    %c61 = arith.constant 61 : index
    %92 = memref.load %arg2[%c61] : memref<98xf32, #tpu.memory_space<smem>>
    %c62 = arith.constant 62 : index
    %93 = memref.load %arg2[%c62] : memref<98xf32, #tpu.memory_space<smem>>
    %c63 = arith.constant 63 : index
    %94 = memref.load %arg2[%c63] : memref<98xf32, #tpu.memory_space<smem>>
    %c64 = arith.constant 64 : index
    %95 = memref.load %arg2[%c64] : memref<98xf32, #tpu.memory_space<smem>>
    %c65 = arith.constant 65 : index
    %96 = memref.load %arg2[%c65] : memref<98xf32, #tpu.memory_space<smem>>
    %c66 = arith.constant 66 : index
    %97 = memref.load %arg2[%c66] : memref<98xf32, #tpu.memory_space<smem>>
    %c67 = arith.constant 67 : index
    %98 = memref.load %arg2[%c67] : memref<98xf32, #tpu.memory_space<smem>>
    %c68 = arith.constant 68 : index
    %99 = memref.load %arg2[%c68] : memref<98xf32, #tpu.memory_space<smem>>
    %c69 = arith.constant 69 : index
    %100 = memref.load %arg2[%c69] : memref<98xf32, #tpu.memory_space<smem>>
    %c70 = arith.constant 70 : index
    %101 = memref.load %arg2[%c70] : memref<98xf32, #tpu.memory_space<smem>>
    %c71 = arith.constant 71 : index
    %102 = memref.load %arg2[%c71] : memref<98xf32, #tpu.memory_space<smem>>
    %c72 = arith.constant 72 : index
    %103 = memref.load %arg2[%c72] : memref<98xf32, #tpu.memory_space<smem>>
    %c73 = arith.constant 73 : index
    %104 = memref.load %arg2[%c73] : memref<98xf32, #tpu.memory_space<smem>>
    %c74 = arith.constant 74 : index
    %105 = memref.load %arg2[%c74] : memref<98xf32, #tpu.memory_space<smem>>
    %c75 = arith.constant 75 : index
    %106 = memref.load %arg2[%c75] : memref<98xf32, #tpu.memory_space<smem>>
    %c76 = arith.constant 76 : index
    %107 = memref.load %arg2[%c76] : memref<98xf32, #tpu.memory_space<smem>>
    %c77 = arith.constant 77 : index
    %108 = memref.load %arg2[%c77] : memref<98xf32, #tpu.memory_space<smem>>
    %c78 = arith.constant 78 : index
    %109 = memref.load %arg2[%c78] : memref<98xf32, #tpu.memory_space<smem>>
    %c79 = arith.constant 79 : index
    %110 = memref.load %arg2[%c79] : memref<98xf32, #tpu.memory_space<smem>>
    %c80 = arith.constant 80 : index
    %111 = memref.load %arg2[%c80] : memref<98xf32, #tpu.memory_space<smem>>
    %c81 = arith.constant 81 : index
    %112 = memref.load %arg2[%c81] : memref<98xf32, #tpu.memory_space<smem>>
    %c82 = arith.constant 82 : index
    %113 = memref.load %arg2[%c82] : memref<98xf32, #tpu.memory_space<smem>>
    %c83 = arith.constant 83 : index
    %114 = memref.load %arg2[%c83] : memref<98xf32, #tpu.memory_space<smem>>
    %c84 = arith.constant 84 : index
    %115 = memref.load %arg2[%c84] : memref<98xf32, #tpu.memory_space<smem>>
    %c85 = arith.constant 85 : index
    %116 = memref.load %arg2[%c85] : memref<98xf32, #tpu.memory_space<smem>>
    %c86 = arith.constant 86 : index
    %117 = memref.load %arg2[%c86] : memref<98xf32, #tpu.memory_space<smem>>
    %c87 = arith.constant 87 : index
    %118 = memref.load %arg2[%c87] : memref<98xf32, #tpu.memory_space<smem>>
    %c88 = arith.constant 88 : index
    %119 = memref.load %arg2[%c88] : memref<98xf32, #tpu.memory_space<smem>>
    %c89 = arith.constant 89 : index
    %120 = memref.load %arg2[%c89] : memref<98xf32, #tpu.memory_space<smem>>
    %c90 = arith.constant 90 : index
    %121 = memref.load %arg2[%c90] : memref<98xf32, #tpu.memory_space<smem>>
    %c91 = arith.constant 91 : index
    %122 = memref.load %arg2[%c91] : memref<98xf32, #tpu.memory_space<smem>>
    %c92 = arith.constant 92 : index
    %123 = memref.load %arg2[%c92] : memref<98xf32, #tpu.memory_space<smem>>
    %c93 = arith.constant 93 : index
    %124 = memref.load %arg2[%c93] : memref<98xf32, #tpu.memory_space<smem>>
    %c94 = arith.constant 94 : index
    %125 = memref.load %arg2[%c94] : memref<98xf32, #tpu.memory_space<smem>>
    %c95 = arith.constant 95 : index
    %126 = memref.load %arg2[%c95] : memref<98xf32, #tpu.memory_space<smem>>
    %c96 = arith.constant 96 : index
    %127 = memref.load %arg2[%c96] : memref<98xf32, #tpu.memory_space<smem>>
    %c97 = arith.constant 97 : index
    %128 = memref.load %arg2[%c97] : memref<98xf32, #tpu.memory_space<smem>>
    %c0_21 = arith.constant 0 : index
    %129 = memref.load %arg3[%c0_21] : memref<1xf32, #tpu.memory_space<smem>>
    %cst_22 = arith.constant 0.000000e+00 : f32
    %130 = vector.broadcast %cst_22 : f32 to vector<1x256xf32>
    %cst_23 = arith.constant 0.000000e+00 : f32
    %131 = vector.broadcast %cst_23 : f32 to vector<1x256xf32>
    %cst_24 = arith.constant 0.000000e+00 : f32
    %132 = vector.broadcast %cst_24 : f32 to vector<1x256xf32>
    %c0_25 = arith.constant 0 : index
    %c77_26 = arith.constant 77 : index
    %133 = vector.load %arg9[%c0_25, %c77_26] : memref<1x512xf32, #tpu.memory_space<vmem>>, vector<1x256xf32>
    %134 = vector.broadcast %31 : f32 to vector<1x256xf32>
    %135 = arith.mulf %134, %133 : vector<1x256xf32>
    %136 = arith.addf %131, %135 : vector<1x256xf32>
    %c0_27 = arith.constant 0 : index
    %c77_28 = arith.constant 77 : index
    %137 = vector.load %arg10[%c0_27, %c77_28] : memref<1x512xf32, #tpu.memory_space<vmem>>, vector<1x256xf32>
    %138 = vector.broadcast %80 : f32 to vector<1x256xf32>
    %139 = arith.mulf %138, %137 : vector<1x256xf32>
    %140 = arith.addf %132, %139 : vector<1x256xf32>
    %c0_29 = arith.constant 0 : index
    %c93_30 = arith.constant 93 : index
    %141 = vector.load %arg9[%c0_29, %c93_30] : memref<1x512xf32, #tpu.memory_space<vmem>>, vector<1x256xf32>
    %142 = vector.broadcast %38 : f32 to vector<1x256xf32>
    %143 = arith.mulf %142, %141 : vector<1x256xf32>
    %144 = arith.addf %136, %143 : vector<1x256xf32>
    %c0_31 = arith.constant 0 : index
    %c93_32 = arith.constant 93 : index
    %145 = vector.load %arg10[%c0_31, %c93_32] : memref<1x512xf32, #tpu.memory_space<vmem>>, vector<1x256xf32>
    %146 = vector.broadcast %87 : f32 to vector<1x256xf32>
    %147 = arith.mulf %146, %145 : vector<1x256xf32>
    %148 = arith.addf %140, %147 : vector<1x256xf32>
    %c0_33 = arith.constant 0 : index
    %c109 = arith.constant 109 : index
    %149 = vector.load %arg9[%c0_33, %c109] : memref<1x512xf32, #tpu.memory_space<vmem>>, vector<1x256xf32>
    %150 = vector.broadcast %45 : f32 to vector<1x256xf32>
    %151 = arith.mulf %150, %149 : vector<1x256xf32>
    %152 = arith.addf %144, %151 : vector<1x256xf32>
    %c0_34 = arith.constant 0 : index
    %c109_35 = arith.constant 109 : index
    %153 = vector.load %arg10[%c0_34, %c109_35] : memref<1x512xf32, #tpu.memory_space<vmem>>, vector<1x256xf32>
    %154 = vector.broadcast %94 : f32 to vector<1x256xf32>
    %155 = arith.mulf %154, %153 : vector<1x256xf32>
    %156 = arith.addf %148, %155 : vector<1x256xf32>
    %c0_36 = arith.constant 0 : index
    %c125 = arith.constant 125 : index
    %157 = vector.load %arg9[%c0_36, %c125] : memref<1x512xf32, #tpu.memory_space<vmem>>, vector<1x256xf32>
    %158 = vector.broadcast %52 : f32 to vector<1x256xf32>
    %159 = arith.mulf %158, %157 : vector<1x256xf32>
    %160 = arith.addf %152, %159 : vector<1x256xf32>
    %c0_37 = arith.constant 0 : index
    %c125_38 = arith.constant 125 : index
    %161 = vector.load %arg10[%c0_37, %c125_38] : memref<1x512xf32, #tpu.memory_space<vmem>>, vector<1x256xf32>
    %162 = vector.broadcast %101 : f32 to vector<1x256xf32>
    %163 = arith.mulf %162, %161 : vector<1x256xf32>
    %164 = arith.addf %156, %163 : vector<1x256xf32>
    %c0_39 = arith.constant 0 : index
    %c141 = arith.constant 141 : index
    %165 = vector.load %arg9[%c0_39, %c141] : memref<1x512xf32, #tpu.memory_space<vmem>>, vector<1x256xf32>
    %166 = vector.broadcast %59 : f32 to vector<1x256xf32>
    %167 = arith.mulf %166, %165 : vector<1x256xf32>
    %168 = arith.addf %160, %167 : vector<1x256xf32>
    %c0_40 = arith.constant 0 : index
    %c141_41 = arith.constant 141 : index
    %169 = vector.load %arg10[%c0_40, %c141_41] : memref<1x512xf32, #tpu.memory_space<vmem>>, vector<1x256xf32>
    %170 = vector.broadcast %108 : f32 to vector<1x256xf32>
    %171 = arith.mulf %170, %169 : vector<1x256xf32>
    %172 = arith.addf %164, %171 : vector<1x256xf32>
    %c0_42 = arith.constant 0 : index
    %c157 = arith.constant 157 : index
    %173 = vector.load %arg9[%c0_42, %c157] : memref<1x512xf32, #tpu.memory_space<vmem>>, vector<1x256xf32>
    %174 = vector.broadcast %66 : f32 to vector<1x256xf32>
    %175 = arith.mulf %174, %173 : vector<1x256xf32>
    %176 = arith.addf %168, %175 : vector<1x256xf32>
    %c0_43 = arith.constant 0 : index
    %c157_44 = arith.constant 157 : index
    %177 = vector.load %arg10[%c0_43, %c157_44] : memref<1x512xf32, #tpu.memory_space<vmem>>, vector<1x256xf32>
    %178 = vector.broadcast %115 : f32 to vector<1x256xf32>
    %179 = arith.mulf %178, %177 : vector<1x256xf32>
    %180 = arith.addf %172, %179 : vector<1x256xf32>
    %c0_45 = arith.constant 0 : index
    %c173 = arith.constant 173 : index
    %181 = vector.load %arg9[%c0_45, %c173] : memref<1x512xf32, #tpu.memory_space<vmem>>, vector<1x256xf32>
    %182 = vector.broadcast %73 : f32 to vector<1x256xf32>
    %183 = arith.mulf %182, %181 : vector<1x256xf32>
    %184 = arith.addf %176, %183 : vector<1x256xf32>
    %c0_46 = arith.constant 0 : index
    %c173_47 = arith.constant 173 : index
    %185 = vector.load %arg10[%c0_46, %c173_47] : memref<1x512xf32, #tpu.memory_space<vmem>>, vector<1x256xf32>
    %186 = vector.broadcast %122 : f32 to vector<1x256xf32>
    %187 = arith.mulf %186, %185 : vector<1x256xf32>
    %188 = arith.addf %180, %187 : vector<1x256xf32>
    %189 = arith.addf %184, %188 : vector<1x256xf32>
    %c0_48 = arith.constant 0 : index
    %c0_49 = arith.constant 0 : index
    %190 = vector.load %arg4[%c0_48, %c0_49] : memref<7x256xf32, #tpu.memory_space<vmem>>, vector<1x256xf32>
    %191 = arith.mulf %189, %190 : vector<1x256xf32>
    %192 = arith.addf %130, %191 : vector<1x256xf32>
    %cst_50 = arith.constant 0.000000e+00 : f32
    %193 = vector.broadcast %cst_50 : f32 to vector<1x256xf32>
    %cst_51 = arith.constant 0.000000e+00 : f32
    %194 = vector.broadcast %cst_51 : f32 to vector<1x256xf32>
    %c0_52 = arith.constant 0 : index
    %c78_53 = arith.constant 78 : index
    %195 = vector.load %arg9[%c0_52, %c78_53] : memref<1x512xf32, #tpu.memory_space<vmem>>, vector<1x256xf32>
    %196 = vector.broadcast %32 : f32 to vector<1x256xf32>
    %197 = arith.mulf %196, %195 : vector<1x256xf32>
    %198 = arith.addf %193, %197 : vector<1x256xf32>
    %c0_54 = arith.constant 0 : index
    %c78_55 = arith.constant 78 : index
    %199 = vector.load %arg10[%c0_54, %c78_55] : memref<1x512xf32, #tpu.memory_space<vmem>>, vector<1x256xf32>
    %200 = vector.broadcast %81 : f32 to vector<1x256xf32>
    %201 = arith.mulf %200, %199 : vector<1x256xf32>
    %202 = arith.addf %194, %201 : vector<1x256xf32>
    %c0_56 = arith.constant 0 : index
    %c94_57 = arith.constant 94 : index
    %203 = vector.load %arg9[%c0_56, %c94_57] : memref<1x512xf32, #tpu.memory_space<vmem>>, vector<1x256xf32>
    %204 = vector.broadcast %39 : f32 to vector<1x256xf32>
    %205 = arith.mulf %204, %203 : vector<1x256xf32>
    %206 = arith.addf %198, %205 : vector<1x256xf32>
    %c0_58 = arith.constant 0 : index
    %c94_59 = arith.constant 94 : index
    %207 = vector.load %arg10[%c0_58, %c94_59] : memref<1x512xf32, #tpu.memory_space<vmem>>, vector<1x256xf32>
    %208 = vector.broadcast %88 : f32 to vector<1x256xf32>
    %209 = arith.mulf %208, %207 : vector<1x256xf32>
    %210 = arith.addf %202, %209 : vector<1x256xf32>
    %c0_60 = arith.constant 0 : index
    %c110 = arith.constant 110 : index
    %211 = vector.load %arg9[%c0_60, %c110] : memref<1x512xf32, #tpu.memory_space<vmem>>, vector<1x256xf32>
    %212 = vector.broadcast %46 : f32 to vector<1x256xf32>
    %213 = arith.mulf %212, %211 : vector<1x256xf32>
    %214 = arith.addf %206, %213 : vector<1x256xf32>
    %c0_61 = arith.constant 0 : index
    %c110_62 = arith.constant 110 : index
    %215 = vector.load %arg10[%c0_61, %c110_62] : memref<1x512xf32, #tpu.memory_space<vmem>>, vector<1x256xf32>
    %216 = vector.broadcast %95 : f32 to vector<1x256xf32>
    %217 = arith.mulf %216, %215 : vector<1x256xf32>
    %218 = arith.addf %210, %217 : vector<1x256xf32>
    %c0_63 = arith.constant 0 : index
    %c126 = arith.constant 126 : index
    %219 = vector.load %arg9[%c0_63, %c126] : memref<1x512xf32, #tpu.memory_space<vmem>>, vector<1x256xf32>
    %220 = vector.broadcast %53 : f32 to vector<1x256xf32>
    %221 = arith.mulf %220, %219 : vector<1x256xf32>
    %222 = arith.addf %214, %221 : vector<1x256xf32>
    %c0_64 = arith.constant 0 : index
    %c126_65 = arith.constant 126 : index
    %223 = vector.load %arg10[%c0_64, %c126_65] : memref<1x512xf32, #tpu.memory_space<vmem>>, vector<1x256xf32>
    %224 = vector.broadcast %102 : f32 to vector<1x256xf32>
    %225 = arith.mulf %224, %223 : vector<1x256xf32>
    %226 = arith.addf %218, %225 : vector<1x256xf32>
    %c0_66 = arith.constant 0 : index
    %c142 = arith.constant 142 : index
    %227 = vector.load %arg9[%c0_66, %c142] : memref<1x512xf32, #tpu.memory_space<vmem>>, vector<1x256xf32>
    %228 = vector.broadcast %60 : f32 to vector<1x256xf32>
    %229 = arith.mulf %228, %227 : vector<1x256xf32>
    %230 = arith.addf %222, %229 : vector<1x256xf32>
    %c0_67 = arith.constant 0 : index
    %c142_68 = arith.constant 142 : index
    %231 = vector.load %arg10[%c0_67, %c142_68] : memref<1x512xf32, #tpu.memory_space<vmem>>, vector<1x256xf32>
    %232 = vector.broadcast %109 : f32 to vector<1x256xf32>
    %233 = arith.mulf %232, %231 : vector<1x256xf32>
    %234 = arith.addf %226, %233 : vector<1x256xf32>
    %c0_69 = arith.constant 0 : index
    %c158 = arith.constant 158 : index
    %235 = vector.load %arg9[%c0_69, %c158] : memref<1x512xf32, #tpu.memory_space<vmem>>, vector<1x256xf32>
    %236 = vector.broadcast %67 : f32 to vector<1x256xf32>
    %237 = arith.mulf %236, %235 : vector<1x256xf32>
    %238 = arith.addf %230, %237 : vector<1x256xf32>
    %c0_70 = arith.constant 0 : index
    %c158_71 = arith.constant 158 : index
    %239 = vector.load %arg10[%c0_70, %c158_71] : memref<1x512xf32, #tpu.memory_space<vmem>>, vector<1x256xf32>
    %240 = vector.broadcast %116 : f32 to vector<1x256xf32>
    %241 = arith.mulf %240, %239 : vector<1x256xf32>
    %242 = arith.addf %234, %241 : vector<1x256xf32>
    %c0_72 = arith.constant 0 : index
    %c174 = arith.constant 174 : index
    %243 = vector.load %arg9[%c0_72, %c174] : memref<1x512xf32, #tpu.memory_space<vmem>>, vector<1x256xf32>
    %244 = vector.broadcast %74 : f32 to vector<1x256xf32>
    %245 = arith.mulf %244, %243 : vector<1x256xf32>
    %246 = arith.addf %238, %245 : vector<1x256xf32>
    %c0_73 = arith.constant 0 : index
    %c174_74 = arith.constant 174 : index
    %247 = vector.load %arg10[%c0_73, %c174_74] : memref<1x512xf32, #tpu.memory_space<vmem>>, vector<1x256xf32>
    %248 = vector.broadcast %123 : f32 to vector<1x256xf32>
    %249 = arith.mulf %248, %247 : vector<1x256xf32>
    %250 = arith.addf %242, %249 : vector<1x256xf32>
    %251 = arith.addf %246, %250 : vector<1x256xf32>
    %c1_75 = arith.constant 1 : index
    %c0_76 = arith.constant 0 : index
    %252 = vector.load %arg4[%c1_75, %c0_76] : memref<7x256xf32, #tpu.memory_space<vmem>>, vector<1x256xf32>
    %253 = arith.mulf %251, %252 : vector<1x256xf32>
    %254 = arith.addf %192, %253 : vector<1x256xf32>
    %cst_77 = arith.constant 0.000000e+00 : f32
    %255 = vector.broadcast %cst_77 : f32 to vector<1x256xf32>
    %cst_78 = arith.constant 0.000000e+00 : f32
    %256 = vector.broadcast %cst_78 : f32 to vector<1x256xf32>
    %c0_79 = arith.constant 0 : index
    %c79_80 = arith.constant 79 : index
    %257 = vector.load %arg9[%c0_79, %c79_80] : memref<1x512xf32, #tpu.memory_space<vmem>>, vector<1x256xf32>
    %258 = vector.broadcast %33 : f32 to vector<1x256xf32>
    %259 = arith.mulf %258, %257 : vector<1x256xf32>
    %260 = arith.addf %255, %259 : vector<1x256xf32>
    %c0_81 = arith.constant 0 : index
    %c79_82 = arith.constant 79 : index
    %261 = vector.load %arg10[%c0_81, %c79_82] : memref<1x512xf32, #tpu.memory_space<vmem>>, vector<1x256xf32>
    %262 = vector.broadcast %82 : f32 to vector<1x256xf32>
    %263 = arith.mulf %262, %261 : vector<1x256xf32>
    %264 = arith.addf %256, %263 : vector<1x256xf32>
    %c0_83 = arith.constant 0 : index
    %c95_84 = arith.constant 95 : index
    %265 = vector.load %arg9[%c0_83, %c95_84] : memref<1x512xf32, #tpu.memory_space<vmem>>, vector<1x256xf32>
    %266 = vector.broadcast %40 : f32 to vector<1x256xf32>
    %267 = arith.mulf %266, %265 : vector<1x256xf32>
    %268 = arith.addf %260, %267 : vector<1x256xf32>
    %c0_85 = arith.constant 0 : index
    %c95_86 = arith.constant 95 : index
    %269 = vector.load %arg10[%c0_85, %c95_86] : memref<1x512xf32, #tpu.memory_space<vmem>>, vector<1x256xf32>
    %270 = vector.broadcast %89 : f32 to vector<1x256xf32>
    %271 = arith.mulf %270, %269 : vector<1x256xf32>
    %272 = arith.addf %264, %271 : vector<1x256xf32>
    %c0_87 = arith.constant 0 : index
    %c111 = arith.constant 111 : index
    %273 = vector.load %arg9[%c0_87, %c111] : memref<1x512xf32, #tpu.memory_space<vmem>>, vector<1x256xf32>
    %274 = vector.broadcast %47 : f32 to vector<1x256xf32>
    %275 = arith.mulf %274, %273 : vector<1x256xf32>
    %276 = arith.addf %268, %275 : vector<1x256xf32>
    %c0_88 = arith.constant 0 : index
    %c111_89 = arith.constant 111 : index
    %277 = vector.load %arg10[%c0_88, %c111_89] : memref<1x512xf32, #tpu.memory_space<vmem>>, vector<1x256xf32>
    %278 = vector.broadcast %96 : f32 to vector<1x256xf32>
    %279 = arith.mulf %278, %277 : vector<1x256xf32>
    %280 = arith.addf %272, %279 : vector<1x256xf32>
    %c0_90 = arith.constant 0 : index
    %c127 = arith.constant 127 : index
    %281 = vector.load %arg9[%c0_90, %c127] : memref<1x512xf32, #tpu.memory_space<vmem>>, vector<1x256xf32>
    %282 = vector.broadcast %54 : f32 to vector<1x256xf32>
    %283 = arith.mulf %282, %281 : vector<1x256xf32>
    %284 = arith.addf %276, %283 : vector<1x256xf32>
    %c0_91 = arith.constant 0 : index
    %c127_92 = arith.constant 127 : index
    %285 = vector.load %arg10[%c0_91, %c127_92] : memref<1x512xf32, #tpu.memory_space<vmem>>, vector<1x256xf32>
    %286 = vector.broadcast %103 : f32 to vector<1x256xf32>
    %287 = arith.mulf %286, %285 : vector<1x256xf32>
    %288 = arith.addf %280, %287 : vector<1x256xf32>
    %c0_93 = arith.constant 0 : index
    %c143 = arith.constant 143 : index
    %289 = vector.load %arg9[%c0_93, %c143] : memref<1x512xf32, #tpu.memory_space<vmem>>, vector<1x256xf32>
    %290 = vector.broadcast %61 : f32 to vector<1x256xf32>
    %291 = arith.mulf %290, %289 : vector<1x256xf32>
    %292 = arith.addf %284, %291 : vector<1x256xf32>
    %c0_94 = arith.constant 0 : index
    %c143_95 = arith.constant 143 : index
    %293 = vector.load %arg10[%c0_94, %c143_95] : memref<1x512xf32, #tpu.memory_space<vmem>>, vector<1x256xf32>
    %294 = vector.broadcast %110 : f32 to vector<1x256xf32>
    %295 = arith.mulf %294, %293 : vector<1x256xf32>
    %296 = arith.addf %288, %295 : vector<1x256xf32>
    %c0_96 = arith.constant 0 : index
    %c159 = arith.constant 159 : index
    %297 = vector.load %arg9[%c0_96, %c159] : memref<1x512xf32, #tpu.memory_space<vmem>>, vector<1x256xf32>
    %298 = vector.broadcast %68 : f32 to vector<1x256xf32>
    %299 = arith.mulf %298, %297 : vector<1x256xf32>
    %300 = arith.addf %292, %299 : vector<1x256xf32>
    %c0_97 = arith.constant 0 : index
    %c159_98 = arith.constant 159 : index
    %301 = vector.load %arg10[%c0_97, %c159_98] : memref<1x512xf32, #tpu.memory_space<vmem>>, vector<1x256xf32>
    %302 = vector.broadcast %117 : f32 to vector<1x256xf32>
    %303 = arith.mulf %302, %301 : vector<1x256xf32>
    %304 = arith.addf %296, %303 : vector<1x256xf32>
    %c0_99 = arith.constant 0 : index
    %c175 = arith.constant 175 : index
    %305 = vector.load %arg9[%c0_99, %c175] : memref<1x512xf32, #tpu.memory_space<vmem>>, vector<1x256xf32>
    %306 = vector.broadcast %75 : f32 to vector<1x256xf32>
    %307 = arith.mulf %306, %305 : vector<1x256xf32>
    %308 = arith.addf %300, %307 : vector<1x256xf32>
    %c0_100 = arith.constant 0 : index
    %c175_101 = arith.constant 175 : index
    %309 = vector.load %arg10[%c0_100, %c175_101] : memref<1x512xf32, #tpu.memory_space<vmem>>, vector<1x256xf32>
    %310 = vector.broadcast %124 : f32 to vector<1x256xf32>
    %311 = arith.mulf %310, %309 : vector<1x256xf32>
    %312 = arith.addf %304, %311 : vector<1x256xf32>
    %313 = arith.addf %308, %312 : vector<1x256xf32>
    %c2_102 = arith.constant 2 : index
    %c0_103 = arith.constant 0 : index
    %314 = vector.load %arg4[%c2_102, %c0_103] : memref<7x256xf32, #tpu.memory_space<vmem>>, vector<1x256xf32>
    %315 = arith.mulf %313, %314 : vector<1x256xf32>
    %316 = arith.addf %254, %315 : vector<1x256xf32>
    %cst_104 = arith.constant 0.000000e+00 : f32
    %317 = vector.broadcast %cst_104 : f32 to vector<1x256xf32>
    %cst_105 = arith.constant 0.000000e+00 : f32
    %318 = vector.broadcast %cst_105 : f32 to vector<1x256xf32>
    %c0_106 = arith.constant 0 : index
    %c80_107 = arith.constant 80 : index
    %319 = vector.load %arg9[%c0_106, %c80_107] : memref<1x512xf32, #tpu.memory_space<vmem>>, vector<1x256xf32>
    %320 = vector.broadcast %34 : f32 to vector<1x256xf32>
    %321 = arith.mulf %320, %319 : vector<1x256xf32>
    %322 = arith.addf %317, %321 : vector<1x256xf32>
    %c0_108 = arith.constant 0 : index
    %c80_109 = arith.constant 80 : index
    %323 = vector.load %arg10[%c0_108, %c80_109] : memref<1x512xf32, #tpu.memory_space<vmem>>, vector<1x256xf32>
    %324 = vector.broadcast %83 : f32 to vector<1x256xf32>
    %325 = arith.mulf %324, %323 : vector<1x256xf32>
    %326 = arith.addf %318, %325 : vector<1x256xf32>
    %c0_110 = arith.constant 0 : index
    %c96_111 = arith.constant 96 : index
    %327 = vector.load %arg9[%c0_110, %c96_111] : memref<1x512xf32, #tpu.memory_space<vmem>>, vector<1x256xf32>
    %328 = vector.broadcast %41 : f32 to vector<1x256xf32>
    %329 = arith.mulf %328, %327 : vector<1x256xf32>
    %330 = arith.addf %322, %329 : vector<1x256xf32>
    %c0_112 = arith.constant 0 : index
    %c96_113 = arith.constant 96 : index
    %331 = vector.load %arg10[%c0_112, %c96_113] : memref<1x512xf32, #tpu.memory_space<vmem>>, vector<1x256xf32>
    %332 = vector.broadcast %90 : f32 to vector<1x256xf32>
    %333 = arith.mulf %332, %331 : vector<1x256xf32>
    %334 = arith.addf %326, %333 : vector<1x256xf32>
    %c0_114 = arith.constant 0 : index
    %c112 = arith.constant 112 : index
    %335 = vector.load %arg9[%c0_114, %c112] : memref<1x512xf32, #tpu.memory_space<vmem>>, vector<1x256xf32>
    %336 = vector.broadcast %48 : f32 to vector<1x256xf32>
    %337 = arith.mulf %336, %335 : vector<1x256xf32>
    %338 = arith.addf %330, %337 : vector<1x256xf32>
    %c0_115 = arith.constant 0 : index
    %c112_116 = arith.constant 112 : index
    %339 = vector.load %arg10[%c0_115, %c112_116] : memref<1x512xf32, #tpu.memory_space<vmem>>, vector<1x256xf32>
    %340 = vector.broadcast %97 : f32 to vector<1x256xf32>
    %341 = arith.mulf %340, %339 : vector<1x256xf32>
    %342 = arith.addf %334, %341 : vector<1x256xf32>
    %c0_117 = arith.constant 0 : index
    %c128_118 = arith.constant 128 : index
    %343 = vector.load %arg9[%c0_117, %c128_118] : memref<1x512xf32, #tpu.memory_space<vmem>>, vector<1x256xf32>
    %344 = vector.broadcast %55 : f32 to vector<1x256xf32>
    %345 = arith.mulf %344, %343 : vector<1x256xf32>
    %346 = arith.addf %338, %345 : vector<1x256xf32>
    %c0_119 = arith.constant 0 : index
    %c128_120 = arith.constant 128 : index
    %347 = vector.load %arg10[%c0_119, %c128_120] : memref<1x512xf32, #tpu.memory_space<vmem>>, vector<1x256xf32>
    %348 = vector.broadcast %104 : f32 to vector<1x256xf32>
    %349 = arith.mulf %348, %347 : vector<1x256xf32>
    %350 = arith.addf %342, %349 : vector<1x256xf32>
    %c0_121 = arith.constant 0 : index
    %c144 = arith.constant 144 : index
    %351 = vector.load %arg9[%c0_121, %c144] : memref<1x512xf32, #tpu.memory_space<vmem>>, vector<1x256xf32>
    %352 = vector.broadcast %62 : f32 to vector<1x256xf32>
    %353 = arith.mulf %352, %351 : vector<1x256xf32>
    %354 = arith.addf %346, %353 : vector<1x256xf32>
    %c0_122 = arith.constant 0 : index
    %c144_123 = arith.constant 144 : index
    %355 = vector.load %arg10[%c0_122, %c144_123] : memref<1x512xf32, #tpu.memory_space<vmem>>, vector<1x256xf32>
    %356 = vector.broadcast %111 : f32 to vector<1x256xf32>
    %357 = arith.mulf %356, %355 : vector<1x256xf32>
    %358 = arith.addf %350, %357 : vector<1x256xf32>
    %c0_124 = arith.constant 0 : index
    %c160 = arith.constant 160 : index
    %359 = vector.load %arg9[%c0_124, %c160] : memref<1x512xf32, #tpu.memory_space<vmem>>, vector<1x256xf32>
    %360 = vector.broadcast %69 : f32 to vector<1x256xf32>
    %361 = arith.mulf %360, %359 : vector<1x256xf32>
    %362 = arith.addf %354, %361 : vector<1x256xf32>
    %c0_125 = arith.constant 0 : index
    %c160_126 = arith.constant 160 : index
    %363 = vector.load %arg10[%c0_125, %c160_126] : memref<1x512xf32, #tpu.memory_space<vmem>>, vector<1x256xf32>
    %364 = vector.broadcast %118 : f32 to vector<1x256xf32>
    %365 = arith.mulf %364, %363 : vector<1x256xf32>
    %366 = arith.addf %358, %365 : vector<1x256xf32>
    %c0_127 = arith.constant 0 : index
    %c176 = arith.constant 176 : index
    %367 = vector.load %arg9[%c0_127, %c176] : memref<1x512xf32, #tpu.memory_space<vmem>>, vector<1x256xf32>
    %368 = vector.broadcast %76 : f32 to vector<1x256xf32>
    %369 = arith.mulf %368, %367 : vector<1x256xf32>
    %370 = arith.addf %362, %369 : vector<1x256xf32>
    %c0_128 = arith.constant 0 : index
    %c176_129 = arith.constant 176 : index
    %371 = vector.load %arg10[%c0_128, %c176_129] : memref<1x512xf32, #tpu.memory_space<vmem>>, vector<1x256xf32>
    %372 = vector.broadcast %125 : f32 to vector<1x256xf32>
    %373 = arith.mulf %372, %371 : vector<1x256xf32>
    %374 = arith.addf %366, %373 : vector<1x256xf32>
    %375 = arith.addf %370, %374 : vector<1x256xf32>
    %c3_130 = arith.constant 3 : index
    %c0_131 = arith.constant 0 : index
    %376 = vector.load %arg4[%c3_130, %c0_131] : memref<7x256xf32, #tpu.memory_space<vmem>>, vector<1x256xf32>
    %377 = arith.mulf %375, %376 : vector<1x256xf32>
    %378 = arith.addf %316, %377 : vector<1x256xf32>
    %cst_132 = arith.constant 0.000000e+00 : f32
    %379 = vector.broadcast %cst_132 : f32 to vector<1x256xf32>
    %cst_133 = arith.constant 0.000000e+00 : f32
    %380 = vector.broadcast %cst_133 : f32 to vector<1x256xf32>
    %c0_134 = arith.constant 0 : index
    %c81_135 = arith.constant 81 : index
    %381 = vector.load %arg9[%c0_134, %c81_135] : memref<1x512xf32, #tpu.memory_space<vmem>>, vector<1x256xf32>
    %382 = vector.broadcast %35 : f32 to vector<1x256xf32>
    %383 = arith.mulf %382, %381 : vector<1x256xf32>
    %384 = arith.addf %379, %383 : vector<1x256xf32>
    %c0_136 = arith.constant 0 : index
    %c81_137 = arith.constant 81 : index
    %385 = vector.load %arg10[%c0_136, %c81_137] : memref<1x512xf32, #tpu.memory_space<vmem>>, vector<1x256xf32>
    %386 = vector.broadcast %84 : f32 to vector<1x256xf32>
    %387 = arith.mulf %386, %385 : vector<1x256xf32>
    %388 = arith.addf %380, %387 : vector<1x256xf32>
    %c0_138 = arith.constant 0 : index
    %c97_139 = arith.constant 97 : index
    %389 = vector.load %arg9[%c0_138, %c97_139] : memref<1x512xf32, #tpu.memory_space<vmem>>, vector<1x256xf32>
    %390 = vector.broadcast %42 : f32 to vector<1x256xf32>
    %391 = arith.mulf %390, %389 : vector<1x256xf32>
    %392 = arith.addf %384, %391 : vector<1x256xf32>
    %c0_140 = arith.constant 0 : index
    %c97_141 = arith.constant 97 : index
    %393 = vector.load %arg10[%c0_140, %c97_141] : memref<1x512xf32, #tpu.memory_space<vmem>>, vector<1x256xf32>
    %394 = vector.broadcast %91 : f32 to vector<1x256xf32>
    %395 = arith.mulf %394, %393 : vector<1x256xf32>
    %396 = arith.addf %388, %395 : vector<1x256xf32>
    %c0_142 = arith.constant 0 : index
    %c113 = arith.constant 113 : index
    %397 = vector.load %arg9[%c0_142, %c113] : memref<1x512xf32, #tpu.memory_space<vmem>>, vector<1x256xf32>
    %398 = vector.broadcast %49 : f32 to vector<1x256xf32>
    %399 = arith.mulf %398, %397 : vector<1x256xf32>
    %400 = arith.addf %392, %399 : vector<1x256xf32>
    %c0_143 = arith.constant 0 : index
    %c113_144 = arith.constant 113 : index
    %401 = vector.load %arg10[%c0_143, %c113_144] : memref<1x512xf32, #tpu.memory_space<vmem>>, vector<1x256xf32>
    %402 = vector.broadcast %98 : f32 to vector<1x256xf32>
    %403 = arith.mulf %402, %401 : vector<1x256xf32>
    %404 = arith.addf %396, %403 : vector<1x256xf32>
    %c0_145 = arith.constant 0 : index
    %c129 = arith.constant 129 : index
    %405 = vector.load %arg9[%c0_145, %c129] : memref<1x512xf32, #tpu.memory_space<vmem>>, vector<1x256xf32>
    %406 = vector.broadcast %56 : f32 to vector<1x256xf32>
    %407 = arith.mulf %406, %405 : vector<1x256xf32>
    %408 = arith.addf %400, %407 : vector<1x256xf32>
    %c0_146 = arith.constant 0 : index
    %c129_147 = arith.constant 129 : index
    %409 = vector.load %arg10[%c0_146, %c129_147] : memref<1x512xf32, #tpu.memory_space<vmem>>, vector<1x256xf32>
    %410 = vector.broadcast %105 : f32 to vector<1x256xf32>
    %411 = arith.mulf %410, %409 : vector<1x256xf32>
    %412 = arith.addf %404, %411 : vector<1x256xf32>
    %c0_148 = arith.constant 0 : index
    %c145 = arith.constant 145 : index
    %413 = vector.load %arg9[%c0_148, %c145] : memref<1x512xf32, #tpu.memory_space<vmem>>, vector<1x256xf32>
    %414 = vector.broadcast %63 : f32 to vector<1x256xf32>
    %415 = arith.mulf %414, %413 : vector<1x256xf32>
    %416 = arith.addf %408, %415 : vector<1x256xf32>
    %c0_149 = arith.constant 0 : index
    %c145_150 = arith.constant 145 : index
    %417 = vector.load %arg10[%c0_149, %c145_150] : memref<1x512xf32, #tpu.memory_space<vmem>>, vector<1x256xf32>
    %418 = vector.broadcast %112 : f32 to vector<1x256xf32>
    %419 = arith.mulf %418, %417 : vector<1x256xf32>
    %420 = arith.addf %412, %419 : vector<1x256xf32>
    %c0_151 = arith.constant 0 : index
    %c161 = arith.constant 161 : index
    %421 = vector.load %arg9[%c0_151, %c161] : memref<1x512xf32, #tpu.memory_space<vmem>>, vector<1x256xf32>
    %422 = vector.broadcast %70 : f32 to vector<1x256xf32>
    %423 = arith.mulf %422, %421 : vector<1x256xf32>
    %424 = arith.addf %416, %423 : vector<1x256xf32>
    %c0_152 = arith.constant 0 : index
    %c161_153 = arith.constant 161 : index
    %425 = vector.load %arg10[%c0_152, %c161_153] : memref<1x512xf32, #tpu.memory_space<vmem>>, vector<1x256xf32>
    %426 = vector.broadcast %119 : f32 to vector<1x256xf32>
    %427 = arith.mulf %426, %425 : vector<1x256xf32>
    %428 = arith.addf %420, %427 : vector<1x256xf32>
    %c0_154 = arith.constant 0 : index
    %c177 = arith.constant 177 : index
    %429 = vector.load %arg9[%c0_154, %c177] : memref<1x512xf32, #tpu.memory_space<vmem>>, vector<1x256xf32>
    %430 = vector.broadcast %77 : f32 to vector<1x256xf32>
    %431 = arith.mulf %430, %429 : vector<1x256xf32>
    %432 = arith.addf %424, %431 : vector<1x256xf32>
    %c0_155 = arith.constant 0 : index
    %c177_156 = arith.constant 177 : index
    %433 = vector.load %arg10[%c0_155, %c177_156] : memref<1x512xf32, #tpu.memory_space<vmem>>, vector<1x256xf32>
    %434 = vector.broadcast %126 : f32 to vector<1x256xf32>
    %435 = arith.mulf %434, %433 : vector<1x256xf32>
    %436 = arith.addf %428, %435 : vector<1x256xf32>
    %437 = arith.addf %432, %436 : vector<1x256xf32>
    %c4_157 = arith.constant 4 : index
    %c0_158 = arith.constant 0 : index
    %438 = vector.load %arg4[%c4_157, %c0_158] : memref<7x256xf32, #tpu.memory_space<vmem>>, vector<1x256xf32>
    %439 = arith.mulf %437, %438 : vector<1x256xf32>
    %440 = arith.addf %378, %439 : vector<1x256xf32>
    %cst_159 = arith.constant 0.000000e+00 : f32
    %441 = vector.broadcast %cst_159 : f32 to vector<1x256xf32>
    %cst_160 = arith.constant 0.000000e+00 : f32
    %442 = vector.broadcast %cst_160 : f32 to vector<1x256xf32>
    %c0_161 = arith.constant 0 : index
    %c82_162 = arith.constant 82 : index
    %443 = vector.load %arg9[%c0_161, %c82_162] : memref<1x512xf32, #tpu.memory_space<vmem>>, vector<1x256xf32>
    %444 = vector.broadcast %36 : f32 to vector<1x256xf32>
    %445 = arith.mulf %444, %443 : vector<1x256xf32>
    %446 = arith.addf %441, %445 : vector<1x256xf32>
    %c0_163 = arith.constant 0 : index
    %c82_164 = arith.constant 82 : index
    %447 = vector.load %arg10[%c0_163, %c82_164] : memref<1x512xf32, #tpu.memory_space<vmem>>, vector<1x256xf32>
    %448 = vector.broadcast %85 : f32 to vector<1x256xf32>
    %449 = arith.mulf %448, %447 : vector<1x256xf32>
    %450 = arith.addf %442, %449 : vector<1x256xf32>
    %c0_165 = arith.constant 0 : index
    %c98 = arith.constant 98 : index
    %451 = vector.load %arg9[%c0_165, %c98] : memref<1x512xf32, #tpu.memory_space<vmem>>, vector<1x256xf32>
    %452 = vector.broadcast %43 : f32 to vector<1x256xf32>
    %453 = arith.mulf %452, %451 : vector<1x256xf32>
    %454 = arith.addf %446, %453 : vector<1x256xf32>
    %c0_166 = arith.constant 0 : index
    %c98_167 = arith.constant 98 : index
    %455 = vector.load %arg10[%c0_166, %c98_167] : memref<1x512xf32, #tpu.memory_space<vmem>>, vector<1x256xf32>
    %456 = vector.broadcast %92 : f32 to vector<1x256xf32>
    %457 = arith.mulf %456, %455 : vector<1x256xf32>
    %458 = arith.addf %450, %457 : vector<1x256xf32>
    %c0_168 = arith.constant 0 : index
    %c114 = arith.constant 114 : index
    %459 = vector.load %arg9[%c0_168, %c114] : memref<1x512xf32, #tpu.memory_space<vmem>>, vector<1x256xf32>
    %460 = vector.broadcast %50 : f32 to vector<1x256xf32>
    %461 = arith.mulf %460, %459 : vector<1x256xf32>
    %462 = arith.addf %454, %461 : vector<1x256xf32>
    %c0_169 = arith.constant 0 : index
    %c114_170 = arith.constant 114 : index
    %463 = vector.load %arg10[%c0_169, %c114_170] : memref<1x512xf32, #tpu.memory_space<vmem>>, vector<1x256xf32>
    %464 = vector.broadcast %99 : f32 to vector<1x256xf32>
    %465 = arith.mulf %464, %463 : vector<1x256xf32>
    %466 = arith.addf %458, %465 : vector<1x256xf32>
    %c0_171 = arith.constant 0 : index
    %c130 = arith.constant 130 : index
    %467 = vector.load %arg9[%c0_171, %c130] : memref<1x512xf32, #tpu.memory_space<vmem>>, vector<1x256xf32>
    %468 = vector.broadcast %57 : f32 to vector<1x256xf32>
    %469 = arith.mulf %468, %467 : vector<1x256xf32>
    %470 = arith.addf %462, %469 : vector<1x256xf32>
    %c0_172 = arith.constant 0 : index
    %c130_173 = arith.constant 130 : index
    %471 = vector.load %arg10[%c0_172, %c130_173] : memref<1x512xf32, #tpu.memory_space<vmem>>, vector<1x256xf32>
    %472 = vector.broadcast %106 : f32 to vector<1x256xf32>
    %473 = arith.mulf %472, %471 : vector<1x256xf32>
    %474 = arith.addf %466, %473 : vector<1x256xf32>
    %c0_174 = arith.constant 0 : index
    %c146 = arith.constant 146 : index
    %475 = vector.load %arg9[%c0_174, %c146] : memref<1x512xf32, #tpu.memory_space<vmem>>, vector<1x256xf32>
    %476 = vector.broadcast %64 : f32 to vector<1x256xf32>
    %477 = arith.mulf %476, %475 : vector<1x256xf32>
    %478 = arith.addf %470, %477 : vector<1x256xf32>
    %c0_175 = arith.constant 0 : index
    %c146_176 = arith.constant 146 : index
    %479 = vector.load %arg10[%c0_175, %c146_176] : memref<1x512xf32, #tpu.memory_space<vmem>>, vector<1x256xf32>
    %480 = vector.broadcast %113 : f32 to vector<1x256xf32>
    %481 = arith.mulf %480, %479 : vector<1x256xf32>
    %482 = arith.addf %474, %481 : vector<1x256xf32>
    %c0_177 = arith.constant 0 : index
    %c162 = arith.constant 162 : index
    %483 = vector.load %arg9[%c0_177, %c162] : memref<1x512xf32, #tpu.memory_space<vmem>>, vector<1x256xf32>
    %484 = vector.broadcast %71 : f32 to vector<1x256xf32>
    %485 = arith.mulf %484, %483 : vector<1x256xf32>
    %486 = arith.addf %478, %485 : vector<1x256xf32>
    %c0_178 = arith.constant 0 : index
    %c162_179 = arith.constant 162 : index
    %487 = vector.load %arg10[%c0_178, %c162_179] : memref<1x512xf32, #tpu.memory_space<vmem>>, vector<1x256xf32>
    %488 = vector.broadcast %120 : f32 to vector<1x256xf32>
    %489 = arith.mulf %488, %487 : vector<1x256xf32>
    %490 = arith.addf %482, %489 : vector<1x256xf32>
    %c0_180 = arith.constant 0 : index
    %c178 = arith.constant 178 : index
    %491 = vector.load %arg9[%c0_180, %c178] : memref<1x512xf32, #tpu.memory_space<vmem>>, vector<1x256xf32>
    %492 = vector.broadcast %78 : f32 to vector<1x256xf32>
    %493 = arith.mulf %492, %491 : vector<1x256xf32>
    %494 = arith.addf %486, %493 : vector<1x256xf32>
    %c0_181 = arith.constant 0 : index
    %c178_182 = arith.constant 178 : index
    %495 = vector.load %arg10[%c0_181, %c178_182] : memref<1x512xf32, #tpu.memory_space<vmem>>, vector<1x256xf32>
    %496 = vector.broadcast %127 : f32 to vector<1x256xf32>
    %497 = arith.mulf %496, %495 : vector<1x256xf32>
    %498 = arith.addf %490, %497 : vector<1x256xf32>
    %499 = arith.addf %494, %498 : vector<1x256xf32>
    %c5_183 = arith.constant 5 : index
    %c0_184 = arith.constant 0 : index
    %500 = vector.load %arg4[%c5_183, %c0_184] : memref<7x256xf32, #tpu.memory_space<vmem>>, vector<1x256xf32>
    %501 = arith.mulf %499, %500 : vector<1x256xf32>
    %502 = arith.addf %440, %501 : vector<1x256xf32>
    %cst_185 = arith.constant 0.000000e+00 : f32
    %503 = vector.broadcast %cst_185 : f32 to vector<1x256xf32>
    %cst_186 = arith.constant 0.000000e+00 : f32
    %504 = vector.broadcast %cst_186 : f32 to vector<1x256xf32>
    %c0_187 = arith.constant 0 : index
    %c83_188 = arith.constant 83 : index
    %505 = vector.load %arg9[%c0_187, %c83_188] : memref<1x512xf32, #tpu.memory_space<vmem>>, vector<1x256xf32>
    %506 = vector.broadcast %37 : f32 to vector<1x256xf32>
    %507 = arith.mulf %506, %505 : vector<1x256xf32>
    %508 = arith.addf %503, %507 : vector<1x256xf32>
    %c0_189 = arith.constant 0 : index
    %c83_190 = arith.constant 83 : index
    %509 = vector.load %arg10[%c0_189, %c83_190] : memref<1x512xf32, #tpu.memory_space<vmem>>, vector<1x256xf32>
    %510 = vector.broadcast %86 : f32 to vector<1x256xf32>
    %511 = arith.mulf %510, %509 : vector<1x256xf32>
    %512 = arith.addf %504, %511 : vector<1x256xf32>
    %c0_191 = arith.constant 0 : index
    %c99 = arith.constant 99 : index
    %513 = vector.load %arg9[%c0_191, %c99] : memref<1x512xf32, #tpu.memory_space<vmem>>, vector<1x256xf32>
    %514 = vector.broadcast %44 : f32 to vector<1x256xf32>
    %515 = arith.mulf %514, %513 : vector<1x256xf32>
    %516 = arith.addf %508, %515 : vector<1x256xf32>
    %c0_192 = arith.constant 0 : index
    %c99_193 = arith.constant 99 : index
    %517 = vector.load %arg10[%c0_192, %c99_193] : memref<1x512xf32, #tpu.memory_space<vmem>>, vector<1x256xf32>
    %518 = vector.broadcast %93 : f32 to vector<1x256xf32>
    %519 = arith.mulf %518, %517 : vector<1x256xf32>
    %520 = arith.addf %512, %519 : vector<1x256xf32>
    %c0_194 = arith.constant 0 : index
    %c115 = arith.constant 115 : index
    %521 = vector.load %arg9[%c0_194, %c115] : memref<1x512xf32, #tpu.memory_space<vmem>>, vector<1x256xf32>
    %522 = vector.broadcast %51 : f32 to vector<1x256xf32>
    %523 = arith.mulf %522, %521 : vector<1x256xf32>
    %524 = arith.addf %516, %523 : vector<1x256xf32>
    %c0_195 = arith.constant 0 : index
    %c115_196 = arith.constant 115 : index
    %525 = vector.load %arg10[%c0_195, %c115_196] : memref<1x512xf32, #tpu.memory_space<vmem>>, vector<1x256xf32>
    %526 = vector.broadcast %100 : f32 to vector<1x256xf32>
    %527 = arith.mulf %526, %525 : vector<1x256xf32>
    %528 = arith.addf %520, %527 : vector<1x256xf32>
    %c0_197 = arith.constant 0 : index
    %c131 = arith.constant 131 : index
    %529 = vector.load %arg9[%c0_197, %c131] : memref<1x512xf32, #tpu.memory_space<vmem>>, vector<1x256xf32>
    %530 = vector.broadcast %58 : f32 to vector<1x256xf32>
    %531 = arith.mulf %530, %529 : vector<1x256xf32>
    %532 = arith.addf %524, %531 : vector<1x256xf32>
    %c0_198 = arith.constant 0 : index
    %c131_199 = arith.constant 131 : index
    %533 = vector.load %arg10[%c0_198, %c131_199] : memref<1x512xf32, #tpu.memory_space<vmem>>, vector<1x256xf32>
    %534 = vector.broadcast %107 : f32 to vector<1x256xf32>
    %535 = arith.mulf %534, %533 : vector<1x256xf32>
    %536 = arith.addf %528, %535 : vector<1x256xf32>
    %c0_200 = arith.constant 0 : index
    %c147 = arith.constant 147 : index
    %537 = vector.load %arg9[%c0_200, %c147] : memref<1x512xf32, #tpu.memory_space<vmem>>, vector<1x256xf32>
    %538 = vector.broadcast %65 : f32 to vector<1x256xf32>
    %539 = arith.mulf %538, %537 : vector<1x256xf32>
    %540 = arith.addf %532, %539 : vector<1x256xf32>
    %c0_201 = arith.constant 0 : index
    %c147_202 = arith.constant 147 : index
    %541 = vector.load %arg10[%c0_201, %c147_202] : memref<1x512xf32, #tpu.memory_space<vmem>>, vector<1x256xf32>
    %542 = vector.broadcast %114 : f32 to vector<1x256xf32>
    %543 = arith.mulf %542, %541 : vector<1x256xf32>
    %544 = arith.addf %536, %543 : vector<1x256xf32>
    %c0_203 = arith.constant 0 : index
    %c163 = arith.constant 163 : index
    %545 = vector.load %arg9[%c0_203, %c163] : memref<1x512xf32, #tpu.memory_space<vmem>>, vector<1x256xf32>
    %546 = vector.broadcast %72 : f32 to vector<1x256xf32>
    %547 = arith.mulf %546, %545 : vector<1x256xf32>
    %548 = arith.addf %540, %547 : vector<1x256xf32>
    %c0_204 = arith.constant 0 : index
    %c163_205 = arith.constant 163 : index
    %549 = vector.load %arg10[%c0_204, %c163_205] : memref<1x512xf32, #tpu.memory_space<vmem>>, vector<1x256xf32>
    %550 = vector.broadcast %121 : f32 to vector<1x256xf32>
    %551 = arith.mulf %550, %549 : vector<1x256xf32>
    %552 = arith.addf %544, %551 : vector<1x256xf32>
    %c0_206 = arith.constant 0 : index
    %c179 = arith.constant 179 : index
    %553 = vector.load %arg9[%c0_206, %c179] : memref<1x512xf32, #tpu.memory_space<vmem>>, vector<1x256xf32>
    %554 = vector.broadcast %79 : f32 to vector<1x256xf32>
    %555 = arith.mulf %554, %553 : vector<1x256xf32>
    %556 = arith.addf %548, %555 : vector<1x256xf32>
    %c0_207 = arith.constant 0 : index
    %c179_208 = arith.constant 179 : index
    %557 = vector.load %arg10[%c0_207, %c179_208] : memref<1x512xf32, #tpu.memory_space<vmem>>, vector<1x256xf32>
    %558 = vector.broadcast %128 : f32 to vector<1x256xf32>
    %559 = arith.mulf %558, %557 : vector<1x256xf32>
    %560 = arith.addf %552, %559 : vector<1x256xf32>
    %561 = arith.addf %556, %560 : vector<1x256xf32>
    %c6_209 = arith.constant 6 : index
    %c0_210 = arith.constant 0 : index
    %562 = vector.load %arg4[%c6_209, %c0_210] : memref<7x256xf32, #tpu.memory_space<vmem>>, vector<1x256xf32>
    %563 = arith.mulf %561, %562 : vector<1x256xf32>
    %564 = arith.addf %502, %563 : vector<1x256xf32>
    %565 = vector.broadcast %129 : f32 to vector<1x256xf32>
    %566 = arith.addf %564, %565 : vector<1x256xf32>
    %567 = arith.negf %566 : vector<1x256xf32>
    %568 = math.exp %567 : vector<1x256xf32>
    %cst_211 = arith.constant 1.000000e+00 : f32
    %569 = vector.broadcast %cst_211 : f32 to vector<1x256xf32>
    %570 = arith.addf %569, %568 : vector<1x256xf32>
    %571 = arith.divf %569, %570 : vector<1x256xf32>
    %c0_212 = arith.constant 0 : index
    %c0_213 = arith.constant 0 : index
    %c0_214 = arith.constant 0 : index
    %572 = vector.load %arg6[%c0_212, %c0_213, %c0_214] : memref<1x1x256xf32, #tpu.memory_space<vmem>>, vector<1x1x256xf32>
    %573 = vector.shape_cast %572 : vector<1x1x256xf32> to vector<1x256xf32>
    %574 = vector.shape_cast %571 : vector<1x256xf32> to vector<1x1x256xf32>
    tpu.vector_store %arg6[%c0_212, %c0_213, %c0_214], %574 {strides = array<i32>} : memref<1x1x256xf32, #tpu.memory_space<vmem>>, vector<1x1x256xf32>,
    return
  }
  func.func @transform_0(%arg0: i32, %arg1: i32) -> i32 {
    %c0_i32 = arith.constant 0 : i32
    %c0_i32_0 = arith.constant 0 : i32
    return %c0_i32 : i32
  }
  func.func @transform_1(%arg0: i32, %arg1: i32) -> i32 {
    %c0_i32 = arith.constant 0 : i32
    %c0_i32_0 = arith.constant 0 : i32
    return %c0_i32 : i32
  }
  func.func @transform_2(%arg0: i32, %arg1: i32) -> (i32, i32) {
    %c0_i32 = arith.constant 0 : i32
    %c0_i32_0 = arith.constant 0 : i32
    %c0_i32_1 = arith.constant 0 : i32
    return %c0_i32, %c0_i32_0 : i32, i32
  }
  func.func @transform_3(%arg0: i32, %arg1: i32) -> (i32, i32, i32) {
    %c0_i32 = arith.constant 0 : i32
    %c0_i32_0 = arith.constant 0 : i32
    return %arg0, %arg1, %c0_i32 : i32, i32, i32
  }
  func.func @transform_4(%arg0: i32, %arg1: i32) -> (i32, i32, i32) {
    %c0_i32 = arith.constant 0 : i32
    %c0_i32_0 = arith.constant 0 : i32
    %c0_i32_1 = arith.constant 0 : i32
    return %arg0, %c0_i32, %c0_i32_0 : i32, i32, i32
  }
}

</mosaic_0001>

<llo_original>
// kernel: tpu_custom_call.1
$region0: #{tpu_custom_call.1}
  #allocation0 [shape = 'u32[]', space=smem, size = 0x4, offset = 0x4, fixed_abs, tag = 'smem constant byte address 0x4 - core index']
  #allocation1 [shape = 'u32[144,128]{1,0:T(1,128)}', space=vmem, size = 0x12000, scoped, tag = 'internal scratch']
  #allocation2 [shape = 'f32[1,256]{1,0:T(1,128)}', space=vmem, size = 0x400, scoped, tag = 'scratch operand']
  #allocation3 [shape = 'f32[1,256]{1,0:T(1,128)}', space=vmem, size = 0x400, scoped, tag = 'scratch operand']
  #allocation4 [shape = 'f32[1,512]{1,0:T(1,128)}', space=vmem, size = 0x800, scoped, tag = 'scratch operand']
  #allocation5 [shape = 'f32[1,512]{1,0:T(1,128)}', space=vmem, size = 0x800, scoped, tag = 'scratch operand']
  #allocation6 [shape = 'f32[1]{0:T(128)S(6)}', space=smem, size = 0x200, scoped, tag = 'scoped memory for tpu_custom_call.1']
  %s0 = inlined_call_operand.vmem [shape: f32[98], index: 0, kind: input, shape index: {}]
  %s1 = inlined_call_operand.<no memory space> [shape: f32[1], index: 1, kind: input, shape index: {}]
  %s2 = inlined_call_operand.hbm [shape: f32[7,256], index: 2, kind: input, shape index: {}]
  %s3 = inlined_call_operand.hbm [shape: f32[2,4,256], index: 3, kind: input, shape index: {}]
  %s4 = inlined_call_operand.hbm [shape: f32[2,1,256], index: 4, kind: output, shape index: {}]
  %s5 = sld [smem:[#allocation0]]
  $region61: #{tpu_custom_call.1} parent=0
    _
  %s7 = ssub.s32 1, %s5
  %s8 = scalar_select 0, %s7, %s5
  %9 = sst [smem:[#allocation6]] %s1
  $region1: #{tpu_custom_call.1} parent=0
    #allocation7 [shape = 'u8[512]{0}', space=smem, size = 0x200, scoped, tag = 'input window, operand 0, single buffered']
    #allocation8 [shape = 's32[2]{0}', space=sflag, size = 0x8, scoped, tag = 'scoped memory for tpu_custom_call.1']
    #allocation9 [shape = 's32[2]{0}', space=sflag, size = 0x8, scoped, tag = 'scoped memory for tpu_custom_call.1']
    #allocation10 [shape = 's32[2]{0}', space=sflag, size = 0x8, scoped, tag = 'scoped memory for tpu_custom_call.1']
    #allocation11 [shape = 'u8[8192]{0}', space=vmem, size = 0x2000, scoped, tag = 'input window, operand 2, single buffered']
    #allocation12 [shape = 'u8[8192]{0}', space=vmem, size = 0x2000, scoped, tag = 'input window, operand 3']
    #allocation13 [shape = 's32[2]{0}', space=sflag, size = 0x8, scoped, tag = 'scoped memory for tpu_custom_call.1']
    #allocation14 [shape = 'u8[2048]{0}', space=vmem, size = 0x800, scoped, tag = 'output window, operand 0']
    %10 = vsyncpa [#allocation10], 0
    %11 = vsyncpa [#allocation8], 0
    %12 = vsyncpa [#allocation13], 0
    %s13 = scalar_lea.sflag [#allocation13], 1
    %14 = vsyncpa %s13, 0
    %15 = vsyncpa [#allocation9], 0
    %s16 = scalar_lea.sflag [#allocation9], 1
    %17 = vsyncpa %s16, 0
    loop: start=0, step=1, limit=4
    $region2: #{tpu_custom_call.1} parent=1 // loop_pre_header
      _
    $region3: #{tpu_custom_call.1} parent=1 // loop_header
      %s19 = sphi 0, %s23
      %p20 = scmp.ge.s32.totalorder %s19, 4
      %s26 = sphi 0, %s38
      %s27 = sphi 0, %s34
      %s28 = sphi 0, %s26
      %s29 = sphi 0, %s27
      %s30 = sphi 0, %s28
      %s31 = sphi 0, %s29
      %s39 = sphi 0, %s39
      %s41 = sphi 0, %s39
      %s42 = sphi 0, %s41
      %s56 = sphi 0, %s42
      %s60 = sphi 0, %s60
      %s62 = sphi 0, %s60
      %s63 = sphi 0, %s62
      %s77 = sphi 0, %s63
      %s81 = sphi 0, %s81
      %s83 = sphi 0, %s81
      %s84 = sphi 0, %s83
      %s98 = sphi 0, %s84
      %s106 = sphi 0, %s108
      %s109 = sphi 0, %s106
      %s110 = sphi 0, %s109
      %s126 = sphi 0, %s110
      %s132 = sphi 0, %s134
      %s135 = sphi 0, %s132
      %s136 = sphi 0, %s135
      %s152 = sphi 0, %s136
    $region4: #{tpu_custom_call.1} parent=1 // loop_header_branch
      %22 = sbr.rel (%p20) target = $region8
    $region5: #{tpu_custom_call.1} parent=1 // loop_body
      %s24 = ssub.s32 %s19, 1
      %s25 = ssub.s32 %s19, 2
      %s32 = sadd.s32 1, %s27
      %p33 = scmp.ge.s32.totalorder %s32, 1
      %s34 = scalar_select %p33, 0, %s32
      %s35 = sadd.s32 1, %s26
      %s36 = scalar_select %p33, %s35, %s26
      %p37 = scmp.ge.s32.totalorder %s36, 2
      %s38 = scalar_select %p37, 0, %s36
      %s40 = sadd.s32 %s39, 1
      %p43 = scmp.eq.s32.totalorder %s19, 1
      %p44 = scmp.ne.s32.totalorder %s39, %s41
      %p45 = scmp.eq.s32.totalorder %s19, 0
      %p46 = por %p44, %p45
      %p47 = scmp.ne.s32.totalorder %s39, %s41
      %p48 = scmp.eq.s32.totalorder %s24, 1
      %p49 = por %p47, %p48
      %p50 = scmp.ne.s32.totalorder %s41, %s42
      %p51 = scmp.eq.s32.totalorder %s24, 0
      %p52 = por %p50, %p51
      %p53 = scmp.ne.s32.totalorder %s41, %s42
      %p54 = scmp.eq.s32.totalorder %s25, 1
      %p55 = por %p53, %p54
      %p57 = scmp.ne.s32.totalorder %s42, %s56
      %p58 = scmp.eq.s32.totalorder %s25, 0
      %p59 = por %p57, %p58
      %s61 = sadd.s32 %s60, 1
      %p64 = scmp.eq.s32.totalorder %s19, 1
      %p65 = scmp.ne.s32.totalorder %s60, %s62
      %p66 = scmp.eq.s32.totalorder %s19, 0
      %p67 = por %p65, %p66
      %p68 = scmp.ne.s32.totalorder %s60, %s62
      %p69 = scmp.eq.s32.totalorder %s24, 1
      %p70 = por %p68, %p69
      %p71 = scmp.ne.s32.totalorder %s62, %s63
      %p72 = scmp.eq.s32.totalorder %s24, 0
      %p73 = por %p71, %p72
      %p74 = scmp.ne.s32.totalorder %s62, %s63
      %p75 = scmp.eq.s32.totalorder %s25, 1
      %p76 = por %p74, %p75
      %p78 = scmp.ne.s32.totalorder %s63, %s77
      %p79 = scmp.eq.s32.totalorder %s25, 0
      %p80 = por %p78, %p79
      %s82 = sadd.s32 %s81, 1
      %p85 = scmp.eq.s32.totalorder %s19, 1
      %p86 = scmp.ne.s32.totalorder %s81, %s83
      %p87 = scmp.eq.s32.totalorder %s19, 0
      %p88 = por %p86, %p87
      %p89 = scmp.ne.s32.totalorder %s81, %s83
      %p90 = scmp.eq.s32.totalorder %s24, 1
      %p91 = por %p89, %p90
      %p92 = scmp.ne.s32.totalorder %s83, %s84
      %p93 = scmp.eq.s32.totalorder %s24, 0
      %p94 = por %p92, %p93
      %p95 = scmp.ne.s32.totalorder %s83, %s84
      %p96 = scmp.eq.s32.totalorder %s25, 1
      %p97 = por %p95, %p96
      %p99 = scmp.ne.s32.totalorder %s84, %s98
      %p100 = scmp.eq.s32.totalorder %s25, 0
      %p101 = por %p99, %p100
      %s102 = ssub.s32 %s26, %s38
      %s103 = ssub.s32 %s27, %s34
      %s104 = sor.u32 %s102, %s103
      %p105 = scmp.eq.s32.totalorder %s104, 0
      %s107 = sadd.s32 %s106, 1
      %s108 = scalar_select %p105, %s106, %s107
      %p111 = pneg %p105
      %p112 = scmp.eq.s32.totalorder %s19, 1
      %p113 = por %p111, %p112
      %p114 = scmp.ne.s32.totalorder %s106, %s109
      %p115 = scmp.eq.s32.totalorder %s19, 0
      %p116 = por %p114, %p115
      %p117 = scmp.ne.s32.totalorder %s106, %s109
      %p118 = scmp.eq.s32.totalorder %s24, 1
      %p119 = por %p117, %p118
      %p120 = scmp.ne.s32.totalorder %s109, %s110
      %p121 = scmp.eq.s32.totalorder %s24, 0
      %p122 = por %p120, %p121
      %p123 = scmp.ne.s32.totalorder %s109, %s110
      %p124 = scmp.eq.s32.totalorder %s25, 1
      %p125 = por %p123, %p124
      %p127 = scmp.ne.s32.totalorder %s110, %s126
      %p128 = scmp.eq.s32.totalorder %s25, 0
      %p129 = por %p127, %p128
      %s130 = ssub.s32 %s26, %s38
      %p131 = scmp.eq.s32.totalorder %s130, 0
      %s133 = sadd.s32 %s132, 1
      %s134 = scalar_select %p131, %s132, %s133
      %p137 = pneg %p131
      %p138 = scmp.eq.s32.totalorder %s19, 1
      %p139 = por %p137, %p138
      %p140 = scmp.ne.s32.totalorder %s132, %s135
      %p141 = scmp.eq.s32.totalorder %s19, 0
      %p142 = por %p140, %p141
      %p143 = scmp.ne.s32.totalorder %s132, %s135
      %p144 = scmp.eq.s32.totalorder %s24, 1
      %p145 = por %p143, %p144
      %p146 = scmp.ne.s32.totalorder %s135, %s136
      %p147 = scmp.eq.s32.totalorder %s24, 0
      %p148 = por %p146, %p147
      %p149 = scmp.ne.s32.totalorder %s135, %s136
      %p150 = scmp.eq.s32.totalorder %s25, 1
      %p151 = por %p149, %p150
      %p153 = scmp.ne.s32.totalorder %s136, %s152
      %p154 = scmp.eq.s32.totalorder %s25, 0
      %p155 = por %p153, %p154
      %p156 = scmp.le.s32.totalorder 1, %s19
      %p157 = scmp.lt.s32.totalorder %s19, 3
      %p158 = pnand %p156, %p157
      %p159 = pneg %p158
      // Predicated region
      $region9: #{tpu_custom_call.1} parent=5 // pred_check
        _
      $region10: #{tpu_custom_call.1} parent=5 // pred_check_branch
        %161 = sbr.rel (%p158) target = $region12
      $region11: #{tpu_custom_call.1} parent=5 // pred_region
        %s162 = ssub.s32 %s19, 1
        // Predicated region
        $region13: #{tpu_custom_call.1} parent=11 // pred_check
          %p163 = pneg %p52
        $region14: #{tpu_custom_call.1} parent=11 // pred_check_branch
          %165 = sbr.rel (%p163) target = $region16
        $region15: #{tpu_custom_call.1} parent=11 // pred_region
          %s167 = ssub.s32 16, 16
          %168 = vsyncadd [#allocation10], %s167
          %s170 = sshll.u32 %s0, 4
          %s171 = int_to_ptr.vmem [resolvable:$true] %s170
          %173 = dma.vmem_to_smem %s171, 16, [#allocation7], [#allocation10]
        $region16: #{tpu_custom_call.1} parent=11 // pred_fallthru
          _
        // Predicated region
        $region17: #{tpu_custom_call.1} parent=11 // pred_check
          %p174 = pneg %p73
        $region18: #{tpu_custom_call.1} parent=11 // pred_check_branch
          %176 = sbr.rel (%p174) target = $region20
        $region19: #{tpu_custom_call.1} parent=11 // pred_region
          _
        $region20: #{tpu_custom_call.1} parent=11 // pred_fallthru
          _
        // Predicated region
        $region21: #{tpu_custom_call.1} parent=11 // pred_check
          %p177 = pneg %p94
        $region22: #{tpu_custom_call.1} parent=11 // pred_check_branch
          %179 = sbr.rel (%p177) target = $region24
        $region23: #{tpu_custom_call.1} parent=11 // pred_region
          %s181 = ssub.s32 256, 256
          %182 = vsyncadd [#allocation8], %s181
          %s184 = sshll.u32 [#allocation11], 4
          %s185 = int_to_ptr.vmem [resolvable:$true] %s184
          %187 = dma.hbm_to_vmem [thread:$0]  %s2, 256, %s185, [#allocation8]
        $region24: #{tpu_custom_call.1} parent=11 // pred_fallthru
          _
      $region12: #{tpu_custom_call.1} parent=5 // pred_fallthru
        _
      %p188 = scmp.lt.s32.totalorder %s19, 2
      // Predicated region
      $region25: #{tpu_custom_call.1} parent=5 // pred_check
        %p189 = pneg %p188
      $region26: #{tpu_custom_call.1} parent=5 // pred_check_branch
        %191 = sbr.rel (%p189) target = $region28
      $region27: #{tpu_custom_call.1} parent=5 // pred_region
        // Predicated region
        $region29: #{tpu_custom_call.1} parent=27 // pred_check
          %p192 = pneg %p116
        $region30: #{tpu_custom_call.1} parent=27 // pred_check_branch
          %194 = sbr.rel (%p192) target = $region32
        $region31: #{tpu_custom_call.1} parent=27 // pred_region
          %s195 = sand.u32 %s106, 1
          %s196 = scalar_lea.sflag [#allocation13], %s195
          %s197 = sand.u32 %s106, 1
          %s198 = smul.addr %s197, 8
          %s199 = scalar_lea.vmem [#allocation12], %s198
          %s201 = ssub.s32 128, 128
          %202 = vsyncadd %s196, %s201
          %s203 = smul.addr %s27, 2
          %s204 = smul.addr %s26, 2
          %s205 = sadd.s32 %s203, %s204
          %s206 = smul.addr %s205, 64
          %s207 = scalar_lea.hbm %s3, %s206
          %s209 = sshll.u32 %s199, 4
          %s210 = int_to_ptr.vmem [resolvable:$true] %s209
          %212 = dma.hbm_to_vmem [thread:$0]  %s207, 128, %s210, %s196
        $region32: #{tpu_custom_call.1} parent=27 // pred_fallthru
          _
      $region28: #{tpu_custom_call.1} parent=5 // pred_fallthru
        _
      %p213 = scmp.le.s32.totalorder 1, %s19
      %p214 = scmp.lt.s32.totalorder %s19, 3
      %p215 = pnand %p213, %p214
      %p216 = pneg %p215
      // Predicated region
      $region33: #{tpu_custom_call.1} parent=5 // pred_check
        _
      $region34: #{tpu_custom_call.1} parent=5 // pred_check_branch
        %218 = sbr.rel (%p215) target = $region36
      $region35: #{tpu_custom_call.1} parent=5 // pred_region
        %s219 = ssub.s32 %s19, 1
        // Predicated region
        $region37: #{tpu_custom_call.1} parent=35 // pred_check
          %p220 = pneg %p52
        $region38: #{tpu_custom_call.1} parent=35 // pred_check_branch
          %222 = sbr.rel (%p220) target = $region40
        $region39: #{tpu_custom_call.1} parent=35 // pred_region
          %223 = dma.done [#allocation10], 16
        $region40: #{tpu_custom_call.1} parent=35 // pred_fallthru
          _
        // Predicated region
        $region41: #{tpu_custom_call.1} parent=35 // pred_check
          %p224 = pneg %p94
        $region42: #{tpu_custom_call.1} parent=35 // pred_check_branch
          %226 = sbr.rel (%p224) target = $region44
        $region43: #{tpu_custom_call.1} parent=35 // pred_region
          %227 = dma.done [#allocation8], 256
        $region44: #{tpu_custom_call.1} parent=35 // pred_fallthru
          _
        %s228 = sand.u32 %s109, 1
        %s229 = scalar_lea.sflag [#allocation13], %s228
        %s230 = sand.u32 %s109, 1
        %s231 = smul.addr %s230, 8
        %s232 = scalar_lea.vmem [#allocation12], %s231
        // Predicated region
        $region45: #{tpu_custom_call.1} parent=35 // pred_check
          %p233 = pneg %p122
        $region46: #{tpu_custom_call.1} parent=35 // pred_check_branch
          %235 = sbr.rel (%p233) target = $region48
        $region47: #{tpu_custom_call.1} parent=35 // pred_region
          %236 = dma.done %s229, 128
        $region48: #{tpu_custom_call.1} parent=35 // pred_fallthru
          _
        %237 = sfence
        %p238 = pneg %p52
        %p239 = pneg %p49
        %p240 = pneg %p73
        %p241 = pneg %p70
        %p242 = pneg %p94
        %p243 = pneg %p91
        %s244 = sand.u32 %s109, 1
        %s245 = scalar_lea.sflag [#allocation13], %s244
        %s246 = sand.u32 %s109, 1
        %s247 = smul.addr %s246, 8
        %s248 = scalar_lea.vmem [#allocation12], %s247
        %p249 = pneg %p122
        %p250 = pneg %p119
        %p251 = pneg %p148
        %p252 = pneg %p145
        %s253 = sand.u32 %s135, 1
        %s254 = scalar_lea.sflag [#allocation9], %s253
        %s255 = sand.u32 %s135, 1
        %s256 = smul.addr %s255, 2
        %s257 = scalar_lea.vmem [#allocation14], %s256
        %v258 = vld [vmem:[%s232] ss:$4 sm:$0x3]
        %v259 = vadd.f32 %v258, 0.0
        %s260 = scalar_lea.vmem %s232, 1 [#allocation12]
        %v261 = vld [vmem:[%s260] ss:$4 sm:$0x3]
        %v262 = vmax.f32 %v258, %v261
        %v263 = vadd.f32 %v259, %v261
        %s264 = scalar_lea.vmem %s232, 2 [#allocation12]
        %v265 = vld [vmem:[%s264] ss:$4 sm:$0x3]
        %v266 = vmax.f32 %v262, %v265
        %v267 = vadd.f32 %v263, %v265
        %s268 = scalar_lea.vmem %s232, 3 [#allocation12]
        %v269 = vld [vmem:[%s268] ss:$4 sm:$0x3]
        %v270 = vmax.f32 %v266, %v269
        %v271 = vadd.f32 %v267, %v269
        %v272 = vlaneseq
        %vm273 = vcmp.ge.s32.totalorder %v272, 0
        %vm274 = vcmp.lt.s32.totalorder %v272, 128
        %vm275 = vmand %vm273, %vm274
        %276 = vst.msk [vmem:[#allocation4] sm:$0x1] %vm275, 0.0
        %277 = vst.msk [vmem:[#allocation4 + $0x3] sm:$0x1] %vm275, 0.0
        %278 = vst.msk [vmem:[#allocation5] sm:$0x1] %vm275, 0.0
        %279 = vst.msk [vmem:[#allocation5 + $0x3] sm:$0x1] %vm275, 0.0
        %vm280 = vcmp.lt.s32.totalorder %v272, 256
        %vm281 = vmand %vm273, %vm280
        %282 = vst.msk [vmem:[#allocation4 + $0x1] sm:$0x3] %vm281, %v270
        %v283 = vmul.f32 %v271, 0.25
        %284 = vst.msk [vmem:[#allocation5 + $0x1] sm:$0x3] %vm281, %v283
        %s285 = sld [smem:[#allocation7]]
        %s286 = sld [smem:[#allocation7 + $0x1]]
        %s287 = sld [smem:[#allocation7 + $0x2]]
        %s288 = sld [smem:[#allocation7 + $0x3]]
        %s289 = sld [smem:[#allocation7 + $0x4]]
        %s290 = sld [smem:[#allocation7 + $0x5]]
        %s291 = sld [smem:[#allocation7 + $0x6]]
        %s292 = sld [smem:[#allocation7 + $0x7]]
        %s293 = sld [smem:[#allocation7 + $0x8]]
        %s294 = sld [smem:[#allocation7 + $0x9]]
        %s295 = sld [smem:[#allocation7 + $0xa]]
        %s296 = sld [smem:[#allocation7 + $0xb]]
        %s297 = sld [smem:[#allocation7 + $0xc]]
        %s298 = sld [smem:[#allocation7 + $0xd]]
        %s299 = sld [smem:[#allocation7 + $0xe]]
        %s300 = sld [smem:[#allocation7 + $0xf]]
        %s301 = sld [smem:[#allocation7 + $0x10]]
        %s302 = sld [smem:[#allocation7 + $0x11]]
        %s303 = sld [smem:[#allocation7 + $0x12]]
        %s304 = sld [smem:[#allocation7 + $0x13]]
        %s305 = sld [smem:[#allocation7 + $0x14]]
        %s306 = sld [smem:[#allocation7 + $0x15]]
        %s307 = sld [smem:[#allocation7 + $0x16]]
        %s308 = sld [smem:[#allocation7 + $0x17]]
        %s309 = sld [smem:[#allocation7 + $0x18]]
        %s310 = sld [smem:[#allocation7 + $0x19]]
        %s311 = sld [smem:[#allocation7 + $0x1a]]
        %s312 = sld [smem:[#allocation7 + $0x1b]]
        %s313 = sld [smem:[#allocation7 + $0x1c]]
        %s314 = sld [smem:[#allocation7 + $0x1d]]
        %s315 = sld [smem:[#allocation7 + $0x1e]]
        %s316 = sld [smem:[#allocation7 + $0x1f]]
        %s317 = sld [smem:[#allocation7 + $0x20]]
        %s318 = sld [smem:[#allocation7 + $0x21]]
        %s319 = sld [smem:[#allocation7 + $0x22]]
        %s320 = sld [smem:[#allocation7 + $0x23]]
        %s321 = sld [smem:[#allocation7 + $0x24]]
        %s322 = sld [smem:[#allocation7 + $0x25]]
        %s323 = sld [smem:[#allocation7 + $0x26]]
        %s324 = sld [smem:[#allocation7 + $0x27]]
        %s325 = sld [smem:[#allocation7 + $0x28]]
        %s326 = sld [smem:[#allocation7 + $0x29]]
        %s327 = sld [smem:[#allocation7 + $0x2a]]
        %s328 = sld [smem:[#allocation7 + $0x2b]]
        %s329 = sld [smem:[#allocation7 + $0x2c]]
        %s330 = sld [smem:[#allocation7 + $0x2d]]
        %s331 = sld [smem:[#allocation7 + $0x2e]]
        %s332 = sld [smem:[#allocation7 + $0x2f]]
        %s333 = sld [smem:[#allocation7 + $0x30]]
        %s334 = sld [smem:[#allocation7 + $0x31]]
        %s335 = sld [smem:[#allocation7 + $0x32]]
        %s336 = sld [smem:[#allocation7 + $0x33]]
        %s337 = sld [smem:[#allocation7 + $0x34]]
        %s338 = sld [smem:[#allocation7 + $0x35]]
        %s339 = sld [smem:[#allocation7 + $0x36]]
        %s340 = sld [smem:[#allocation7 + $0x37]]
        %s341 = sld [smem:[#allocation7 + $0x38]]
        %s342 = sld [smem:[#allocation7 + $0x39]]
        %s343 = sld [smem:[#allocation7 + $0x3a]]
        %s344 = sld [smem:[#allocation7 + $0x3b]]
        %s345 = sld [smem:[#allocation7 + $0x3c]]
        %s346 = sld [smem:[#allocation7 + $0x3d]]
        %s347 = sld [smem:[#allocation7 + $0x3e]]
        %s348 = sld [smem:[#allocation7 + $0x3f]]
        %s349 = sld [smem:[#allocation7 + $0x40]]
        %s350 = sld [smem:[#allocation7 + $0x41]]
        %s351 = sld [smem:[#allocation7 + $0x42]]
        %s352 = sld [smem:[#allocation7 + $0x43]]
        %s353 = sld [smem:[#allocation7 + $0x44]]
        %s354 = sld [smem:[#allocation7 + $0x45]]
        %s355 = sld [smem:[#allocation7 + $0x46]]
        %s356 = sld [smem:[#allocation7 + $0x47]]
        %s357 = sld [smem:[#allocation7 + $0x48]]
        %s358 = sld [smem:[#allocation7 + $0x49]]
        %s359 = sld [smem:[#allocation7 + $0x4a]]
        %s360 = sld [smem:[#allocation7 + $0x4b]]
        %s361 = sld [smem:[#allocation7 + $0x4c]]
        %s362 = sld [smem:[#allocation7 + $0x4d]]
        %s363 = sld [smem:[#allocation7 + $0x4e]]
        %s364 = sld [smem:[#allocation7 + $0x4f]]
        %s365 = sld [smem:[#allocation7 + $0x50]]
        %s366 = sld [smem:[#allocation7 + $0x51]]
        %s367 = sld [smem:[#allocation7 + $0x52]]
        %s368 = sld [smem:[#allocation7 + $0x53]]
        %s369 = sld [smem:[#allocation7 + $0x54]]
        %s370 = sld [smem:[#allocation7 + $0x55]]
        %s371 = sld [smem:[#allocation7 + $0x56]]
        %s372 = sld [smem:[#allocation7 + $0x57]]
        %s373 = sld [smem:[#allocation7 + $0x58]]
        %s374 = sld [smem:[#allocation7 + $0x59]]
        %s375 = sld [smem:[#allocation7 + $0x5a]]
        %s376 = sld [smem:[#allocation7 + $0x5b]]
        %s377 = sld [smem:[#allocation7 + $0x5c]]
        %s378 = sld [smem:[#allocation7 + $0x5d]]
        %s379 = sld [smem:[#allocation7 + $0x5e]]
        %s380 = sld [smem:[#allocation7 + $0x5f]]
        %s381 = sld [smem:[#allocation7 + $0x60]]
        %s382 = sld [smem:[#allocation7 + $0x61]]
        %s383 = sld [smem:[#allocation6]]
        %v384 = vld [vmem:[#allocation4] sm:$0x7]
        %v385 = vstv %s285
        %v386 = vmul.f32 %v385, %v384
        %v387 = vadd.f32 %v386, 0.0
        %v388 = vld [vmem:[#allocation5] sm:$0x7]
        %v389 = vstv %s334
        %v390 = vmul.f32 %v389, %v388
        %v391 = vadd.f32 %v390, 0.0
        %v392 = vstv %s292
        %v393 = vmul.f32 %v392, %v384
        %395 = vrot.lane.b32.xlu0 %v393, 112
        %v396 = vpop.permute.xlu0 %395
        %v397 = vrot.slane %v396, 1
        %vm398 = vcmask 916480
        %v399 = vsel %vm398, %v396, %v397
        %v401 = vadd.f32 %v387, %v399
        %v402 = vstv %s341
        %v403 = vmul.f32 %v402, %v388
        %405 = vrot.lane.b32.xlu0 %v403, 112
        %v406 = vpop.permute.xlu0 %405
        %v407 = vrot.slane %v406, 1
        %v408 = vsel %vm398, %v406, %v407
        %v410 = vadd.f32 %v391, %v408
        %v411 = vstv %s299
        %v412 = vmul.f32 %v411, %v384
        %414 = vrot.lane.b32.xlu0 %v412, 96
        %v415 = vpop.permute.xlu0 %414
        %v416 = vrot.slane %v415, 1
        %vm417 = vcmask 785408
        %v418 = vsel %vm417, %v415, %v416
        %v420 = vadd.f32 %v401, %v418
        %v421 = vstv %s348
        %v422 = vmul.f32 %v421, %v388
        %424 = vrot.lane.b32.xlu0 %v422, 96
        %v425 = vpop.permute.xlu0 %424
        %v426 = vrot.slane %v425, 1
        %v427 = vsel %vm417, %v425, %v426
        %v429 = vadd.f32 %v410, %v427
        %v430 = vstv %s306
        %v431 = vmul.f32 %v430, %v384
        %433 = vrot.lane.b32.xlu0 %v431, 80
        %v434 = vpop.permute.xlu0 %433
        %v435 = vrot.slane %v434, 1
        %vm436 = vcmask 654336
        %v437 = vsel %vm436, %v434, %v435
        %v439 = vadd.f32 %v420, %v437
        %v440 = vstv %s355
        %v441 = vmul.f32 %v440, %v388
        %443 = vrot.lane.b32.xlu0 %v441, 80
        %v444 = vpop.permute.xlu0 %443
        %v445 = vrot.slane %v444, 1
        %v446 = vsel %vm436, %v444, %v445
        %v448 = vadd.f32 %v429, %v446
        %v449 = vld [vmem:[#allocation4 + $0x1] sm:$0x7]
        %v450 = vstv %s313
        %v451 = vmul.f32 %v450, %v449
        %453 = vrot.lane.b32.xlu0 %v451, 64
        %v454 = vpop.permute.xlu0 %453
        %v455 = vrot.slane %v454, 7
        %vm456 = vcmask 523264
        %v457 = vsel %vm456, %v455, %v454
        %v459 = vadd.f32 %v439, %v457
        %v460 = vld [vmem:[#allocation5 + $0x1] sm:$0x7]
        %v461 = vstv %s362
        %v462 = vmul.f32 %v461, %v460
        %464 = vrot.lane.b32.xlu0 %v462, 64
        %v465 = vpop.permute.xlu0 %464
        %v466 = vrot.slane %v465, 7
        %v467 = vsel %vm456, %v466, %v465
        %v469 = vadd.f32 %v448, %v467
        %v470 = vstv %s320
        %v471 = vmul.f32 %v470, %v449
        %473 = vrot.lane.b32.xlu0 %v471, 48
        %v474 = vpop.permute.xlu0 %473
        %v475 = vrot.slane %v474, 7
        %vm476 = vcmask 392192
        %v477 = vsel %vm476, %v475, %v474
        %v479 = vadd.f32 %v459, %v477
        %v480 = vstv %s369
        %v481 = vmul.f32 %v480, %v460
        %483 = vrot.lane.b32.xlu0 %v481, 48
        %v484 = vpop.permute.xlu0 %483
        %v485 = vrot.slane %v484, 7
        %v486 = vsel %vm476, %v485, %v484
        %v488 = vadd.f32 %v469, %v486
        %v489 = vstv %s327
        %v490 = vmul.f32 %v489, %v449
        %492 = vrot.lane.b32.xlu0 %v490, 32
        %v493 = vpop.permute.xlu0 %492
        %v494 = vrot.slane %v493, 7
        %vm495 = vcmask 261120
        %v496 = vsel %vm495, %v494, %v493
        %v498 = vadd.f32 %v479, %v496
        %v499 = vstv %s376
        %v500 = vmul.f32 %v499, %v460
        %502 = vrot.lane.b32.xlu0 %v500, 32
        %v503 = vpop.permute.xlu0 %502
        %v504 = vrot.slane %v503, 7
        %v505 = vsel %vm495, %v504, %v503
        %v507 = vadd.f32 %v488, %v505
        %v508 = vadd.f32 %v498, %v507
        %v509 = vld [vmem:[#allocation11] ss:$8 sm:$0x3]
        %511 = vrot.lane.b32.xlu0 %v509, 77
        %v512 = vpop.permute.xlu0 %511
        %v513 = vrot.slane %v512, 7
        %vm514 = vcmask 629760
        %v515 = vsel %vm514, %v513, %v512
        %v517 = vmul.f32 %v508, %v515
        %v518 = vadd.f32 %v517, 0.0
        %v519 = vstv %s286
        %v520 = vmul.f32 %v519, %v384
        %v521 = vadd.f32 %v520, 0.0
        %v522 = vstv %s335
        %v523 = vmul.f32 %v522, %v388
        %v524 = vadd.f32 %v523, 0.0
        %v525 = vstv %s293
        %v526 = vmul.f32 %v525, %v384
        %528 = vrot.lane.b32.xlu0 %v526, 112
        %v529 = vpop.permute.xlu0 %528
        %v530 = vrot.slane %v529, 1
        %v531 = vsel %vm398, %v529, %v530
        %v533 = vadd.f32 %v521, %v531
        %v534 = vstv %s342
        %v535 = vmul.f32 %v534, %v388
        %537 = vrot.lane.b32.xlu0 %v535, 112
        %v538 = vpop.permute.xlu0 %537
        %v539 = vrot.slane %v538, 1
        %v540 = vsel %vm398, %v538, %v539
        %v542 = vadd.f32 %v524, %v540
        %v543 = vstv %s300
        %v544 = vmul.f32 %v543, %v384
        %546 = vrot.lane.b32.xlu0 %v544, 96
        %v547 = vpop.permute.xlu0 %546
        %v548 = vrot.slane %v547, 1
        %v549 = vsel %vm417, %v547, %v548
        %v551 = vadd.f32 %v533, %v549
        %v552 = vstv %s349
        %v553 = vmul.f32 %v552, %v388
        %555 = vrot.lane.b32.xlu0 %v553, 96
        %v556 = vpop.permute.xlu0 %555
        %v557 = vrot.slane %v556, 1
        %v558 = vsel %vm417, %v556, %v557
        %v560 = vadd.f32 %v542, %v558
        %v561 = vstv %s307
        %v562 = vmul.f32 %v561, %v384
        %564 = vrot.lane.b32.xlu0 %v562, 80
        %v565 = vpop.permute.xlu0 %564
        %v566 = vrot.slane %v565, 1
        %v567 = vsel %vm436, %v565, %v566
        %v569 = vadd.f32 %v551, %v567
        %v570 = vstv %s356
        %v571 = vmul.f32 %v570, %v388
        %573 = vrot.lane.b32.xlu0 %v571, 80
        %v574 = vpop.permute.xlu0 %573
        %v575 = vrot.slane %v574, 1
        %v576 = vsel %vm436, %v574, %v575
        %v578 = vadd.f32 %v560, %v576
        %v579 = vstv %s314
        %v580 = vmul.f32 %v579, %v449
        %582 = vrot.lane.b32.xlu0 %v580, 64
        %v583 = vpop.permute.xlu0 %582
        %v584 = vrot.slane %v583, 7
        %v585 = vsel %vm456, %v584, %v583
        %v587 = vadd.f32 %v569, %v585
        %v588 = vstv %s363
        %v589 = vmul.f32 %v588, %v460
        %591 = vrot.lane.b32.xlu0 %v589, 64
        %v592 = vpop.permute.xlu0 %591
        %v593 = vrot.slane %v592, 7
        %v594 = vsel %vm456, %v593, %v592
        %v596 = vadd.f32 %v578, %v594
        %v597 = vstv %s321
        %v598 = vmul.f32 %v597, %v449
        %600 = vrot.lane.b32.xlu0 %v598, 48
        %v601 = vpop.permute.xlu0 %600
        %v602 = vrot.slane %v601, 7
        %v603 = vsel %vm476, %v602, %v601
        %v605 = vadd.f32 %v587, %v603
        %v606 = vstv %s370
        %v607 = vmul.f32 %v606, %v460
        %609 = vrot.lane.b32.xlu0 %v607, 48
        %v610 = vpop.permute.xlu0 %609
        %v611 = vrot.slane %v610, 7
        %v612 = vsel %vm476, %v611, %v610
        %v614 = vadd.f32 %v596, %v612
        %v615 = vstv %s328
        %v616 = vmul.f32 %v615, %v449
        %618 = vrot.lane.b32.xlu0 %v616, 32
        %v619 = vpop.permute.xlu0 %618
        %v620 = vrot.slane %v619, 7
        %v621 = vsel %vm495, %v620, %v619
        %v623 = vadd.f32 %v605, %v621
        %v624 = vstv %s377
        %v625 = vmul.f32 %v624, %v460
        %627 = vrot.lane.b32.xlu0 %v625, 32
        %v628 = vpop.permute.xlu0 %627
        %v629 = vrot.slane %v628, 7
        %v630 = vsel %vm495, %v629, %v628
        %v632 = vadd.f32 %v614, %v630
        %v633 = vadd.f32 %v623, %v632
        %s634 = scalar_lea.vmem [#allocation11], 1
        %v635 = vld [vmem:[%s634] ss:$8 sm:$0x3]
        %637 = vrot.lane.b32.xlu0 %v635, 78
        %v638 = vpop.permute.xlu0 %637
        %v639 = vrot.slane %v638, 7
        %vm640 = vcmask 637952
        %v641 = vsel %vm640, %v639, %v638
        %v643 = vmul.f32 %v633, %v641
        %645 = vrot.lane.b32.xlu0 %v643, 127
        %v646 = vpop.permute.xlu0 %645
        %v647 = vrot.slane %v646, 1
        %vm648 = vcmask 1039360
        %v649 = vsel %vm648, %v646, %v647
        %v651 = vadd.f32 %v518, %v649
        %v652 = vstv %s287
        %v653 = vmul.f32 %v652, %v384
        %v654 = vadd.f32 %v653, 0.0
        %v655 = vstv %s336
        %v656 = vmul.f32 %v655, %v388
        %v657 = vadd.f32 %v656, 0.0
        %v658 = vstv %s294
        %v659 = vmul.f32 %v658, %v384
        %661 = vrot.lane.b32.xlu0 %v659, 112
        %v662 = vpop.permute.xlu0 %661
        %v663 = vrot.slane %v662, 1
        %v664 = vsel %vm398, %v662, %v663
        %v666 = vadd.f32 %v654, %v664
        %v667 = vstv %s343
        %v668 = vmul.f32 %v667, %v388
        %670 = vrot.lane.b32.xlu0 %v668, 112
        %v671 = vpop.permute.xlu0 %670
        %v672 = vrot.slane %v671, 1
        %v673 = vsel %vm398, %v671, %v672
        %v675 = vadd.f32 %v657, %v673
        %v676 = vstv %s301
        %v677 = vmul.f32 %v676, %v384
        %679 = vrot.lane.b32.xlu0 %v677, 96
        %v680 = vpop.permute.xlu0 %679
        %v681 = vrot.slane %v680, 1
        %v682 = vsel %vm417, %v680, %v681
        %v684 = vadd.f32 %v666, %v682
        %v685 = vstv %s350
        %v686 = vmul.f32 %v685, %v388
        %688 = vrot.lane.b32.xlu0 %v686, 96
        %v689 = vpop.permute.xlu0 %688
        %v690 = vrot.slane %v689, 1
        %v691 = vsel %vm417, %v689, %v690
        %v693 = vadd.f32 %v675, %v691
        %v694 = vstv %s308
        %v695 = vmul.f32 %v694, %v384
        %697 = vrot.lane.b32.xlu0 %v695, 80
        %v698 = vpop.permute.xlu0 %697
        %v699 = vrot.slane %v698, 1
        %v700 = vsel %vm436, %v698, %v699
        %v702 = vadd.f32 %v684, %v700
        %v703 = vstv %s357
        %v704 = vmul.f32 %v703, %v388
        %706 = vrot.lane.b32.xlu0 %v704, 80
        %v707 = vpop.permute.xlu0 %706
        %v708 = vrot.slane %v707, 1
        %v709 = vsel %vm436, %v707, %v708
        %v711 = vadd.f32 %v693, %v709
        %v712 = vstv %s315
        %v713 = vmul.f32 %v712, %v449
        %715 = vrot.lane.b32.xlu0 %v713, 64
        %v716 = vpop.permute.xlu0 %715
        %v717 = vrot.slane %v716, 7
        %v718 = vsel %vm456, %v717, %v716
        %v720 = vadd.f32 %v702, %v718
        %v721 = vstv %s364
        %v722 = vmul.f32 %v721, %v460
        %724 = vrot.lane.b32.xlu0 %v722, 64
        %v725 = vpop.permute.xlu0 %724
        %v726 = vrot.slane %v725, 7
        %v727 = vsel %vm456, %v726, %v725
        %v729 = vadd.f32 %v711, %v727
        %v730 = vstv %s322
        %v731 = vmul.f32 %v730, %v449
        %733 = vrot.lane.b32.xlu0 %v731, 48
        %v734 = vpop.permute.xlu0 %733
        %v735 = vrot.slane %v734, 7
        %v736 = vsel %vm476, %v735, %v734
        %v738 = vadd.f32 %v720, %v736
        %v739 = vstv %s371
        %v740 = vmul.f32 %v739, %v460
        %742 = vrot.lane.b32.xlu0 %v740, 48
        %v743 = vpop.permute.xlu0 %742
        %v744 = vrot.slane %v743, 7
        %v745 = vsel %vm476, %v744, %v743
        %v747 = vadd.f32 %v729, %v745
        %v748 = vstv %s329
        %v749 = vmul.f32 %v748, %v449
        %751 = vrot.lane.b32.xlu0 %v749, 32
        %v752 = vpop.permute.xlu0 %751
        %v753 = vrot.slane %v752, 7
        %v754 = vsel %vm495, %v753, %v752
        %v756 = vadd.f32 %v738, %v754
        %v757 = vstv %s378
        %v758 = vmul.f32 %v757, %v460
        %760 = vrot.lane.b32.xlu0 %v758, 32
        %v761 = vpop.permute.xlu0 %760
        %v762 = vrot.slane %v761, 7
        %v763 = vsel %vm495, %v762, %v761
        %v765 = vadd.f32 %v747, %v763
        %v766 = vadd.f32 %v756, %v765
        %s767 = scalar_lea.vmem [#allocation11], 2
        %v768 = vld [vmem:[%s767] ss:$8 sm:$0x3]
        %770 = vrot.lane.b32.xlu0 %v768, 79
        %v771 = vpop.permute.xlu0 %770
        %v772 = vrot.slane %v771, 7
        %vm773 = vcmask 646144
        %v774 = vsel %vm773, %v772, %v771
        %v776 = vmul.f32 %v766, %v774
        %778 = vrot.lane.b32.xlu0 %v776, 126
        %v779 = vpop.permute.xlu0 %778
        %v780 = vrot.slane %v779, 1
        %vm781 = vcmask 1031168
        %v782 = vsel %vm781, %v779, %v780
        %v784 = vadd.f32 %v651, %v782
        %v785 = vstv %s288
        %v786 = vmul.f32 %v785, %v384
        %v787 = vadd.f32 %v786, 0.0
        %v788 = vstv %s337
        %v789 = vmul.f32 %v788, %v388
        %v790 = vadd.f32 %v789, 0.0
        %v791 = vstv %s295
        %v792 = vmul.f32 %v791, %v384
        %794 = vrot.lane.b32.xlu0 %v792, 112
        %v795 = vpop.permute.xlu0 %794
        %v796 = vrot.slane %v795, 1
        %v797 = vsel %vm398, %v795, %v796
        %v799 = vadd.f32 %v787, %v797
        %v800 = vstv %s344
        %v801 = vmul.f32 %v800, %v388
        %803 = vrot.lane.b32.xlu0 %v801, 112
        %v804 = vpop.permute.xlu0 %803
        %v805 = vrot.slane %v804, 1
        %v806 = vsel %vm398, %v804, %v805
        %v808 = vadd.f32 %v790, %v806
        %v809 = vstv %s302
        %v810 = vmul.f32 %v809, %v384
        %812 = vrot.lane.b32.xlu0 %v810, 96
        %v813 = vpop.permute.xlu0 %812
        %v814 = vrot.slane %v813, 1
        %v815 = vsel %vm417, %v813, %v814
        %v817 = vadd.f32 %v799, %v815
        %v818 = vstv %s351
        %v819 = vmul.f32 %v818, %v388
        %821 = vrot.lane.b32.xlu0 %v819, 96
        %v822 = vpop.permute.xlu0 %821
        %v823 = vrot.slane %v822, 1
        %v824 = vsel %vm417, %v822, %v823
        %v826 = vadd.f32 %v808, %v824
        %v827 = vld [vmem:[#allocation4 + $0x1] sm:$0x3]
        %v828 = vstv %s309
        %v829 = vmul.f32 %v828, %v827
        %831 = vrot.lane.b32.xlu0 %v829, 80
        %v832 = vpop.permute.xlu0 %831
        %v833 = vrot.slane %v832, 7
        %v834 = vsel %vm436, %v833, %v832
        %v836 = vadd.f32 %v817, %v834
        %v837 = vld [vmem:[#allocation5 + $0x1] sm:$0x3]
        %v838 = vstv %s358
        %v839 = vmul.f32 %v838, %v837
        %841 = vrot.lane.b32.xlu0 %v839, 80
        %v842 = vpop.permute.xlu0 %841
        %v843 = vrot.slane %v842, 7
        %v844 = vsel %vm436, %v843, %v842
        %v846 = vadd.f32 %v826, %v844
        %v847 = vstv %s316
        %v848 = vmul.f32 %v847, %v449
        %850 = vrot.lane.b32.xlu0 %v848, 64
        %v851 = vpop.permute.xlu0 %850
        %v852 = vrot.slane %v851, 7
        %v853 = vsel %vm456, %v852, %v851
        %v855 = vadd.f32 %v836, %v853
        %v856 = vstv %s365
        %v857 = vmul.f32 %v856, %v460
        %859 = vrot.lane.b32.xlu0 %v857, 64
        %v860 = vpop.permute.xlu0 %859
        %v861 = vrot.slane %v860, 7
        %v862 = vsel %vm456, %v861, %v860
        %v864 = vadd.f32 %v846, %v862
        %v865 = vstv %s323
        %v866 = vmul.f32 %v865, %v449
        %868 = vrot.lane.b32.xlu0 %v866, 48
        %v869 = vpop.permute.xlu0 %868
        %v870 = vrot.slane %v869, 7
        %v871 = vsel %vm476, %v870, %v869
        %v873 = vadd.f32 %v855, %v871
        %v874 = vstv %s372
        %v875 = vmul.f32 %v874, %v460
        %877 = vrot.lane.b32.xlu0 %v875, 48
        %v878 = vpop.permute.xlu0 %877
        %v879 = vrot.slane %v878, 7
        %v880 = vsel %vm476, %v879, %v878
        %v882 = vadd.f32 %v864, %v880
        %v883 = vstv %s330
        %v884 = vmul.f32 %v883, %v449
        %886 = vrot.lane.b32.xlu0 %v884, 32
        %v887 = vpop.permute.xlu0 %886
        %v888 = vrot.slane %v887, 7
        %v889 = vsel %vm495, %v888, %v887
        %v891 = vadd.f32 %v873, %v889
        %v892 = vstv %s379
        %v893 = vmul.f32 %v892, %v460
        %895 = vrot.lane.b32.xlu0 %v893, 32
        %v896 = vpop.permute.xlu0 %895
        %v897 = vrot.slane %v896, 7
        %v898 = vsel %vm495, %v897, %v896
        %v900 = vadd.f32 %v882, %v898
        %v901 = vadd.f32 %v891, %v900
        %s902 = scalar_lea.vmem [#allocation11], 3
        %v903 = vld [vmem:[%s902] ss:$8 sm:$0x3]
        %905 = vrot.lane.b32.xlu0 %v903, 80
        %v906 = vpop.permute.xlu0 %905
        %v907 = vrot.slane %v906, 7
        %v908 = vsel %vm436, %v907, %v906
        %v910 = vmul.f32 %v901, %v908
        %912 = vrot.lane.b32.xlu0 %v910, 125
        %v913 = vpop.permute.xlu0 %912
        %v914 = vrot.slane %v913, 1
        %vm915 = vcmask 1022976
        %v916 = vsel %vm915, %v913, %v914
        %v918 = vadd.f32 %v784, %v916
        %v919 = vstv %s289
        %v920 = vmul.f32 %v919, %v384
        %v921 = vadd.f32 %v920, 0.0
        %v922 = vstv %s338
        %v923 = vmul.f32 %v922, %v388
        %v924 = vadd.f32 %v923, 0.0
        %v925 = vstv %s296
        %v926 = vmul.f32 %v925, %v384
        %928 = vrot.lane.b32.xlu0 %v926, 112
        %v929 = vpop.permute.xlu0 %928
        %v930 = vrot.slane %v929, 1
        %v931 = vsel %vm398, %v929, %v930
        %v933 = vadd.f32 %v921, %v931
        %v934 = vstv %s345
        %v935 = vmul.f32 %v934, %v388
        %937 = vrot.lane.b32.xlu0 %v935, 112
        %v938 = vpop.permute.xlu0 %937
        %v939 = vrot.slane %v938, 1
        %v940 = vsel %vm398, %v938, %v939
        %v942 = vadd.f32 %v924, %v940
        %v943 = vstv %s303
        %v944 = vmul.f32 %v943, %v384
        %946 = vrot.lane.b32.xlu0 %v944, 96
        %v947 = vpop.permute.xlu0 %946
        %v948 = vrot.slane %v947, 1
        %v949 = vsel %vm417, %v947, %v948
        %v951 = vadd.f32 %v933, %v949
        %v952 = vstv %s352
        %v953 = vmul.f32 %v952, %v388
        %955 = vrot.lane.b32.xlu0 %v953, 96
        %v956 = vpop.permute.xlu0 %955
        %v957 = vrot.slane %v956, 1
        %v958 = vsel %vm417, %v956, %v957
        %v960 = vadd.f32 %v942, %v958
        %v961 = vstv %s310
        %v962 = vmul.f32 %v961, %v449
        %964 = vrot.lane.b32.xlu0 %v962, 80
        %v965 = vpop.permute.xlu0 %964
        %v966 = vrot.slane %v965, 7
        %v967 = vsel %vm436, %v966, %v965
        %v969 = vadd.f32 %v951, %v967
        %v970 = vstv %s359
        %v971 = vmul.f32 %v970, %v460
        %973 = vrot.lane.b32.xlu0 %v971, 80
        %v974 = vpop.permute.xlu0 %973
        %v975 = vrot.slane %v974, 7
        %v976 = vsel %vm436, %v975, %v974
        %v978 = vadd.f32 %v960, %v976
        %v979 = vstv %s317
        %v980 = vmul.f32 %v979, %v449
        %982 = vrot.lane.b32.xlu0 %v980, 64
        %v983 = vpop.permute.xlu0 %982
        %v984 = vrot.slane %v983, 7
        %v985 = vsel %vm456, %v984, %v983
        %v987 = vadd.f32 %v969, %v985
        %v988 = vstv %s366
        %v989 = vmul.f32 %v988, %v460
        %991 = vrot.lane.b32.xlu0 %v989, 64
        %v992 = vpop.permute.xlu0 %991
        %v993 = vrot.slane %v992, 7
        %v994 = vsel %vm456, %v993, %v992
        %v996 = vadd.f32 %v978, %v994
        %v997 = vstv %s324
        %v998 = vmul.f32 %v997, %v449
        %1000 = vrot.lane.b32.xlu0 %v998, 48
        %v1001 = vpop.permute.xlu0 %1000
        %v1002 = vrot.slane %v1001, 7
        %v1003 = vsel %vm476, %v1002, %v1001
        %v1005 = vadd.f32 %v987, %v1003
        %v1006 = vstv %s373
        %v1007 = vmul.f32 %v1006, %v460
        %1009 = vrot.lane.b32.xlu0 %v1007, 48
        %v1010 = vpop.permute.xlu0 %1009
        %v1011 = vrot.slane %v1010, 7
        %v1012 = vsel %vm476, %v1011, %v1010
        %v1014 = vadd.f32 %v996, %v1012
        %v1015 = vstv %s331
        %v1016 = vmul.f32 %v1015, %v449
        %1018 = vrot.lane.b32.xlu0 %v1016, 32
        %v1019 = vpop.permute.xlu0 %1018
        %v1020 = vrot.slane %v1019, 7
        %v1021 = vsel %vm495, %v1020, %v1019
        %v1023 = vadd.f32 %v1005, %v1021
        %v1024 = vstv %s380
        %v1025 = vmul.f32 %v1024, %v460
        %1027 = vrot.lane.b32.xlu0 %v1025, 32
        %v1028 = vpop.permute.xlu0 %1027
        %v1029 = vrot.slane %v1028, 7
        %v1030 = vsel %vm495, %v1029, %v1028
        %v1032 = vadd.f32 %v1014, %v1030
        %v1033 = vadd.f32 %v1023, %v1032
        %s1034 = scalar_lea.vmem [#allocation11], 4
        %v1035 = vld [vmem:[%s1034] ss:$8 sm:$0x3]
        %1037 = vrot.lane.b32.xlu0 %v1035, 81
        %v1038 = vpop.permute.xlu0 %1037
        %v1039 = vrot.slane %v1038, 7
        %vm1040 = vcmask 662528
        %v1041 = vsel %vm1040, %v1039, %v1038
        %v1043 = vmul.f32 %v1033, %v1041
        %1045 = vrot.lane.b32.xlu0 %v1043, 124
        %v1046 = vpop.permute.xlu0 %1045
        %v1047 = vrot.slane %v1046, 1
        %vm1048 = vcmask 1014784
        %v1049 = vsel %vm1048, %v1046, %v1047
        %v1051 = vadd.f32 %v918, %v1049
        %v1052 = vstv %s290
        %v1053 = vmul.f32 %v1052, %v384
        %v1054 = vadd.f32 %v1053, 0.0
        %v1055 = vstv %s339
        %v1056 = vmul.f32 %v1055, %v388
        %v1057 = vadd.f32 %v1056, 0.0
        %v1058 = vstv %s297
        %v1059 = vmul.f32 %v1058, %v384
        %1061 = vrot.lane.b32.xlu0 %v1059, 112
        %v1062 = vpop.permute.xlu0 %1061
        %v1063 = vrot.slane %v1062, 1
        %v1064 = vsel %vm398, %v1062, %v1063
        %v1066 = vadd.f32 %v1054, %v1064
        %v1067 = vstv %s346
        %v1068 = vmul.f32 %v1067, %v388
        %1070 = vrot.lane.b32.xlu0 %v1068, 112
        %v1071 = vpop.permute.xlu0 %1070
        %v1072 = vrot.slane %v1071, 1
        %v1073 = vsel %vm398, %v1071, %v1072
        %v1075 = vadd.f32 %v1057, %v1073
        %v1076 = vstv %s304
        %v1077 = vmul.f32 %v1076, %v384
        %1079 = vrot.lane.b32.xlu0 %v1077, 96
        %v1080 = vpop.permute.xlu0 %1079
        %v1081 = vrot.slane %v1080, 1
        %v1082 = vsel %vm417, %v1080, %v1081
        %v1084 = vadd.f32 %v1066, %v1082
        %v1085 = vstv %s353
        %v1086 = vmul.f32 %v1085, %v388
        %1088 = vrot.lane.b32.xlu0 %v1086, 96
        %v1089 = vpop.permute.xlu0 %1088
        %v1090 = vrot.slane %v1089, 1
        %v1091 = vsel %vm417, %v1089, %v1090
        %v1093 = vadd.f32 %v1075, %v1091
        %v1094 = vstv %s311
        %v1095 = vmul.f32 %v1094, %v449
        %1097 = vrot.lane.b32.xlu0 %v1095, 80
        %v1098 = vpop.permute.xlu0 %1097
        %v1099 = vrot.slane %v1098, 7
        %v1100 = vsel %vm436, %v1099, %v1098
        %v1102 = vadd.f32 %v1084, %v1100
        %v1103 = vstv %s360
        %v1104 = vmul.f32 %v1103, %v460
        %1106 = vrot.lane.b32.xlu0 %v1104, 80
        %v1107 = vpop.permute.xlu0 %1106
        %v1108 = vrot.slane %v1107, 7
        %v1109 = vsel %vm436, %v1108, %v1107
        %v1111 = vadd.f32 %v1093, %v1109
        %v1112 = vstv %s318
        %v1113 = vmul.f32 %v1112, %v449
        %1115 = vrot.lane.b32.xlu0 %v1113, 64
        %v1116 = vpop.permute.xlu0 %1115
        %v1117 = vrot.slane %v1116, 7
        %v1118 = vsel %vm456, %v1117, %v1116
        %v1120 = vadd.f32 %v1102, %v1118
        %v1121 = vstv %s367
        %v1122 = vmul.f32 %v1121, %v460
        %1124 = vrot.lane.b32.xlu0 %v1122, 64
        %v1125 = vpop.permute.xlu0 %1124
        %v1126 = vrot.slane %v1125, 7
        %v1127 = vsel %vm456, %v1126, %v1125
        %v1129 = vadd.f32 %v1111, %v1127
        %v1130 = vstv %s325
        %v1131 = vmul.f32 %v1130, %v449
        %1133 = vrot.lane.b32.xlu0 %v1131, 48
        %v1134 = vpop.permute.xlu0 %1133
        %v1135 = vrot.slane %v1134, 7
        %v1136 = vsel %vm476, %v1135, %v1134
        %v1138 = vadd.f32 %v1120, %v1136
        %v1139 = vstv %s374
        %v1140 = vmul.f32 %v1139, %v460
        %1142 = vrot.lane.b32.xlu0 %v1140, 48
        %v1143 = vpop.permute.xlu0 %1142
        %v1144 = vrot.slane %v1143, 7
        %v1145 = vsel %vm476, %v1144, %v1143
        %v1147 = vadd.f32 %v1129, %v1145
        %v1148 = vstv %s332
        %v1149 = vmul.f32 %v1148, %v449
        %1151 = vrot.lane.b32.xlu0 %v1149, 32
        %v1152 = vpop.permute.xlu0 %1151
        %v1153 = vrot.slane %v1152, 7
        %v1154 = vsel %vm495, %v1153, %v1152
        %v1156 = vadd.f32 %v1138, %v1154
        %v1157 = vstv %s381
        %v1158 = vmul.f32 %v1157, %v460
        %1160 = vrot.lane.b32.xlu0 %v1158, 32
        %v1161 = vpop.permute.xlu0 %1160
        %v1162 = vrot.slane %v1161, 7
        %v1163 = vsel %vm495, %v1162, %v1161
        %v1165 = vadd.f32 %v1147, %v1163
        %v1166 = vadd.f32 %v1156, %v1165
        %s1167 = scalar_lea.vmem [#allocation11], 5
        %v1168 = vld [vmem:[%s1167] ss:$8 sm:$0x3]
        %1170 = vrot.lane.b32.xlu0 %v1168, 82
        %v1171 = vpop.permute.xlu0 %1170
        %v1172 = vrot.slane %v1171, 7
        %vm1173 = vcmask 670720
        %v1174 = vsel %vm1173, %v1172, %v1171
        %v1176 = vmul.f32 %v1166, %v1174
        %1178 = vrot.lane.b32.xlu0 %v1176, 123
        %v1179 = vpop.permute.xlu0 %1178
        %v1180 = vrot.slane %v1179, 1
        %vm1181 = vcmask 1006592
        %v1182 = vsel %vm1181, %v1179, %v1180
        %v1184 = vadd.f32 %v1051, %v1182
        %v1185 = vstv %s291
        %v1186 = vmul.f32 %v1185, %v384
        %v1187 = vadd.f32 %v1186, 0.0
        %v1188 = vstv %s340
        %v1189 = vmul.f32 %v1188, %v388
        %v1190 = vadd.f32 %v1189, 0.0
        %v1191 = vstv %s298
        %v1192 = vmul.f32 %v1191, %v384
        %1194 = vrot.lane.b32.xlu0 %v1192, 112
        %v1195 = vpop.permute.xlu0 %1194
        %v1196 = vrot.slane %v1195, 1
        %v1197 = vsel %vm398, %v1195, %v1196
        %v1199 = vadd.f32 %v1187, %v1197
        %v1200 = vstv %s347
        %v1201 = vmul.f32 %v1200, %v388
        %1203 = vrot.lane.b32.xlu0 %v1201, 112
        %v1204 = vpop.permute.xlu0 %1203
        %v1205 = vrot.slane %v1204, 1
        %v1206 = vsel %vm398, %v1204, %v1205
        %v1208 = vadd.f32 %v1190, %v1206
        %v1209 = vstv %s305
        %v1210 = vmul.f32 %v1209, %v384
        %1212 = vrot.lane.b32.xlu0 %v1210, 96
        %v1213 = vpop.permute.xlu0 %1212
        %v1214 = vrot.slane %v1213, 1
        %v1215 = vsel %vm417, %v1213, %v1214
        %v1217 = vadd.f32 %v1199, %v1215
        %v1218 = vstv %s354
        %v1219 = vmul.f32 %v1218, %v388
        %1221 = vrot.lane.b32.xlu0 %v1219, 96
        %v1222 = vpop.permute.xlu0 %1221
        %v1223 = vrot.slane %v1222, 1
        %v1224 = vsel %vm417, %v1222, %v1223
        %v1226 = vadd.f32 %v1208, %v1224
        %v1227 = vstv %s312
        %v1228 = vmul.f32 %v1227, %v449
        %1230 = vrot.lane.b32.xlu0 %v1228, 80
        %v1231 = vpop.permute.xlu0 %1230
        %v1232 = vrot.slane %v1231, 7
        %v1233 = vsel %vm436, %v1232, %v1231
        %v1235 = vadd.f32 %v1217, %v1233
        %v1236 = vstv %s361
        %v1237 = vmul.f32 %v1236, %v460
        %1239 = vrot.lane.b32.xlu0 %v1237, 80
        %v1240 = vpop.permute.xlu0 %1239
        %v1241 = vrot.slane %v1240, 7
        %v1242 = vsel %vm436, %v1241, %v1240
        %v1244 = vadd.f32 %v1226, %v1242
        %v1245 = vstv %s319
        %v1246 = vmul.f32 %v1245, %v449
        %1248 = vrot.lane.b32.xlu0 %v1246, 64
        %v1249 = vpop.permute.xlu0 %1248
        %v1250 = vrot.slane %v1249, 7
        %v1251 = vsel %vm456, %v1250, %v1249
        %v1253 = vadd.f32 %v1235, %v1251
        %v1254 = vstv %s368
        %v1255 = vmul.f32 %v1254, %v460
        %1257 = vrot.lane.b32.xlu0 %v1255, 64
        %v1258 = vpop.permute.xlu0 %1257
        %v1259 = vrot.slane %v1258, 7
        %v1260 = vsel %vm456, %v1259, %v1258
        %v1262 = vadd.f32 %v1244, %v1260
        %v1263 = vstv %s326
        %v1264 = vmul.f32 %v1263, %v449
        %1266 = vrot.lane.b32.xlu0 %v1264, 48
        %v1267 = vpop.permute.xlu0 %1266
        %v1268 = vrot.slane %v1267, 7
        %v1269 = vsel %vm476, %v1268, %v1267
        %v1271 = vadd.f32 %v1253, %v1269
        %v1272 = vstv %s375
        %v1273 = vmul.f32 %v1272, %v460
        %1275 = vrot.lane.b32.xlu0 %v1273, 48
        %v1276 = vpop.permute.xlu0 %1275
        %v1277 = vrot.slane %v1276, 7
        %v1278 = vsel %vm476, %v1277, %v1276
        %v1280 = vadd.f32 %v1262, %v1278
        %v1281 = vstv %s333
        %v1282 = vmul.f32 %v1281, %v449
        %1284 = vrot.lane.b32.xlu0 %v1282, 32
        %v1285 = vpop.permute.xlu0 %1284
        %v1286 = vrot.slane %v1285, 7
        %v1287 = vsel %vm495, %v1286, %v1285
        %v1289 = vadd.f32 %v1271, %v1287
        %v1290 = vstv %s382
        %v1291 = vmul.f32 %v1290, %v460
        %1293 = vrot.lane.b32.xlu0 %v1291, 32
        %v1294 = vpop.permute.xlu0 %1293
        %v1295 = vrot.slane %v1294, 7
        %v1296 = vsel %vm495, %v1295, %v1294
        %v1298 = vadd.f32 %v1280, %v1296
        %v1299 = vadd.f32 %v1289, %v1298
        %s1300 = scalar_lea.vmem [#allocation11], 6
        %v1301 = vld [vmem:[%s1300] ss:$8 sm:$0x3]
        %1303 = vrot.lane.b32.xlu0 %v1301, 83
        %v1304 = vpop.permute.xlu0 %1303
        %v1305 = vrot.slane %v1304, 7
        %vm1306 = vcmask 678912
        %v1307 = vsel %vm1306, %v1305, %v1304
        %v1309 = vmul.f32 %v1299, %v1307
        %1311 = vrot.lane.b32.xlu0 %v1309, 122
        %v1312 = vpop.permute.xlu0 %1311
        %v1313 = vrot.slane %v1312, 1
        %vm1314 = vcmask 998400
        %v1315 = vsel %vm1314, %v1312, %v1313
        %v1317 = vadd.f32 %v1184, %v1315
        %v1318 = vstv %s383
        %v1319 = vadd.f32 %v1317, %v1318
        %v1320 = vxor.u32 %v1319, 2147483648
        %v1321 = vmul.f32 %v1320, 1.442695
        %v1322 = vpow.pop %v1321
        %v1323 = vadd.f32 %v1322, 1.0
        %v1324 = vrcp.pop %v1323
        %v1325 = vmul.f32 1.0, %v1324
        %1327 = vrot.lane.b32.xlu0 %v1325, 51
        %v1328 = vpop.permute.xlu0 %1327
        %v1329 = vrot.slane %v1328, 1
        %vm1330 = vcmask 416768
        %v1331 = vsel %vm1330, %v1328, %v1329
        %1333 = vst.msk [vmem:[%s257] sm:$0x3] %vm281, %v1331
        %s1334 = sand.u32 %s135, 1
        %s1335 = scalar_lea.sflag [#allocation9], %s1334
        %s1336 = sand.u32 %s135, 1
        %s1337 = smul.addr %s1336, 2
        %s1338 = scalar_lea.vmem [#allocation14], %s1337
        // Predicated region
        $region49: #{tpu_custom_call.1} parent=35 // pred_check
          %p1339 = pneg %p145
        $region50: #{tpu_custom_call.1} parent=35 // pred_check_branch
          %1341 = sbr.rel (%p1339) target = $region52
        $region51: #{tpu_custom_call.1} parent=35 // pred_region
          %s1343 = ssub.s32 32, 32
          %1344 = vsyncadd %s1335, %s1343
          %s1345 = smul.addr %s28, 2
          %s1346 = smul.addr %s1345, 16
          %s1347 = scalar_lea.hbm %s4, %s1346
          %s1349 = sshll.u32 %s1338, 4
          %s1350 = int_to_ptr.vmem [resolvable:$true] %s1349
          %1352 = dma.vmem_to_hbm [thread:$0]  %s1350, 32, %s1347, %s1335
        $region52: #{tpu_custom_call.1} parent=35 // pred_fallthru
          _
      $region36: #{tpu_custom_call.1} parent=5 // pred_fallthru
        _
      %p1353 = scmp.le.s32.totalorder 2, %s19
      // Predicated region
      $region53: #{tpu_custom_call.1} parent=5 // pred_check
        %p1354 = pneg %p1353
      $region54: #{tpu_custom_call.1} parent=5 // pred_check_branch
        %1356 = sbr.rel (%p1354) target = $region56
      $region55: #{tpu_custom_call.1} parent=5 // pred_region
        %s1357 = ssub.s32 %s19, 2
        // Predicated region
        $region57: #{tpu_custom_call.1} parent=55 // pred_check
          %p1358 = pneg %p151
        $region58: #{tpu_custom_call.1} parent=55 // pred_check_branch
          %1360 = sbr.rel (%p1358) target = $region60
        $region59: #{tpu_custom_call.1} parent=55 // pred_region
          %s1361 = sand.u32 %s136, 1
          %s1362 = scalar_lea.sflag [#allocation9], %s1361
          %s1363 = sand.u32 %s136, 1
          %s1364 = smul.addr %s1363, 2
          %s1365 = scalar_lea.vmem [#allocation14], %s1364
          %1366 = dma.done %s1362, 32
        $region60: #{tpu_custom_call.1} parent=55 // pred_fallthru
          _
      $region56: #{tpu_custom_call.1} parent=5 // pred_fallthru
        _
    $region6: #{tpu_custom_call.1} parent=1 // loop_footer
      %s23 = sadd.s32 1, %s19
    $region7: #{tpu_custom_call.1} parent=1 // loop_footer_branch
      %18 = sbr.rel target = $region3
    $region8: #{tpu_custom_call.1} parent=1 // loop_exit
      _
    %1367 = vsyncpa [#allocation8], 1
    %s1368 = scalar_lea.sflag [#allocation8], 1
    %1369 = vsyncpa %s1368, 1
    %1370 = vsyncpa [#allocation13], 1
    %s1371 = scalar_lea.sflag [#allocation13], 1
    %1372 = vsyncpa %s1371, 1
    %1373 = vsyncpa [#allocation9], 1
    %s1374 = scalar_lea.sflag [#allocation9], 1
    %1375 = vsyncpa %s1374, 1
    %1376 = vsyncpa [#allocation10], 1
    %s1377 = scalar_lea.sflag [#allocation10], 1
    %1378 = vsyncpa %s1377, 1

</llo_original>
